<compile_context>
chip_gen: v6e
topology: v6e:2x2x1
jax: 0.10.0
libtpu: 0.0.40
codegen_flags: <defaults>
</compile_context>

<pallas_src>
import jax
import jax.numpy as jnp
from jax.experimental import pallas as pl
from jax.experimental.pallas import tpu as pltpu

D_IN, D_H1, D_H2 = 768, 384, 192


def _mlp_kernel(x_ref, w1_ref, b1_ref, w2_ref, b2_ref, w3_ref, b3_ref, o_ref):
    # fc1: cast the streamed x block to bf16 in-kernel (no separate XLA cast pass over
    # HBM); MXU matmul with f32 accumulation; bias + ReLU on the f32 accumulator (VPU).
    # dropout1 == identity at inference.
    x = x_ref[...].astype(jnp.bfloat16)
    h = jnp.dot(x, w1_ref[...], preferred_element_type=jnp.float32)
    h = jnp.maximum(h + b1_ref[...], 0.0)
    # fc2: same; dropout2 == identity at inference.
    h = jnp.dot(h.astype(jnp.bfloat16), w2_ref[...], preferred_element_type=jnp.float32)
    h = jnp.maximum(h + b2_ref[...], 0.0)
    # fc3 (K=192, N=1): VPU multiply + lane (XLU) reduction instead of an N=1 vmatmul.
    # TODO(synk): lane-dense (1, tile) output layout would avoid masked vst.msk stores;
    # skipped — reviewer-measured win is modest at tile >= 256 and it adds a transpose.
    o_ref[...] = jnp.sum(h * w3_ref[...], axis=-1, keepdims=True) + b3_ref[...]


def _round_up(n, m):
    return ((n + m - 1) // m) * m


def _select_tile(batch, tile_b):
    """Pick a batch tile: multiple of 256 for large batches (full MXU row passes),
    >= 2 grid steps when the batch allows it (v7x has 2 TensorCores), 8-row granule
    otherwise."""
    tile = min(tile_b, _round_up(batch, 8))
    if batch > 256 and tile >= 256:
        tile = (tile // 256) * 256
        if pl.cdiv(batch, tile) < 2:
            tile = max(256, _round_up(pl.cdiv(batch, 2), 256))
    return max(8, _round_up(tile, 8))


def mapping_model_forward(x, params, *, tile_b=1024):
    """Forward pass of MappingModel.

    x: (B, 768) float array (streamed as-is; cast to bf16 per-block inside the kernel).
    params: dict with w1 (768,384), b1 (1,384), w2 (384,192), b2 (1,192),
            w3 (192,1), b3 (1,1) -- weights stored as (in, out), i.e. torch W^T.
    Returns (B, 1) float32.
    """
    B, d_in = x.shape
    assert d_in == D_IN

    tile = _select_tile(B, tile_b)
    grid = (pl.cdiv(B, tile),)  # ragged final block handled by Pallas masking

    w1 = params["w1"].astype(jnp.bfloat16)
    w2 = params["w2"].astype(jnp.bfloat16)
    b1 = params["b1"].reshape(1, D_H1).astype(jnp.float32)
    b2 = params["b2"].reshape(1, D_H2).astype(jnp.float32)
    w3 = params["w3"].reshape(1, D_H2).astype(jnp.float32)  # row vector for VPU/XLU epilogue
    b3 = params["b3"].reshape(1, 1).astype(jnp.float32)

    const = lambda i: (0, 0)  # grid-invariant blocks: DMA'd once (constant block index)

    rows = grid[0] * tile
    flops = 2 * rows * (D_IN * D_H1 + D_H1 * D_H2 + D_H2)
    bytes_accessed = (
        x.size * x.dtype.itemsize            # activations in (native dtype, no extra pass)
        + B * 1 * 4                          # f32 output
        + (D_IN * D_H1 + D_H1 * D_H2) * 2    # bf16 weights
        + (D_H1 + D_H2 + D_H2 + 1) * 4       # f32 biases + w3 row
    )

    out = pl.pallas_call(
        _mlp_kernel,
        out_shape=jax.ShapeDtypeStruct((B, 1), jnp.float32),
        grid_spec=pltpu.PrefetchScalarGridSpec(
            num_scalar_prefetch=0,
            grid=grid,
            in_specs=[
                pl.BlockSpec((tile, D_IN), lambda i: (i, 0)),  # x tile over batch
                pl.BlockSpec((D_IN, D_H1), const),             # w1 (bf16)
                pl.BlockSpec((1, D_H1), const),                # b1 (f32)
                pl.BlockSpec((D_H1, D_H2), const),             # w2 (bf16)
                pl.BlockSpec((1, D_H2), const),                # b2 (f32)
                pl.BlockSpec((1, D_H2), const),                # w3 row (f32)
                pl.BlockSpec((1, 1), const),                   # b3 (f32)
            ],
            out_specs=pl.BlockSpec((tile, 1), lambda i: (i, 0)),
        ),
        compiler_params=pltpu.CompilerParams(
            dimension_semantics=(pltpu.PARALLEL,),  # batch axis shards across v7x's 2 TCs
            vmem_limit_bytes=32 * 1024 * 1024,      # raise v5e's 16 MiB default; safe on v7x
        ),
        cost_estimate=pl.CostEstimate(
            flops=flops, transcendentals=0, bytes_accessed=bytes_accessed),
    )(x, w1, b1, w2, b2, w3, b3)

    return out


def init_params(key):
    """torch kaiming_normal_(mode='fan_out', nonlinearity='relu'): std = sqrt(2 / out_features),
    biases = 0. Weights stored as (in, out) = torch weight transposed."""
    k1, k2, k3 = jax.random.split(key, 3)

    def kaiming(k, d_in, d_out):
        std = (2.0 / d_out) ** 0.5
        return jax.random.normal(k, (d_in, d_out), dtype=jnp.float32) * std

    return {
        "w1": kaiming(k1, D_IN, D_H1), "b1": jnp.zeros((1, D_H1), jnp.float32),
        "w2": kaiming(k2, D_H1, D_H2), "b2": jnp.zeros((1, D_H2), jnp.float32),
        "w3": kaiming(k3, D_H2, 1),    "b3": jnp.zeros((1, 1), jnp.float32),
    }


def _reference_bf16(x, p):
    """Pure-JAX reference with the same bf16-input / f32-accumulate quantization as the kernel."""
    w1 = p["w1"].astype(jnp.bfloat16)
    w2 = p["w2"].astype(jnp.bfloat16)
    h = jnp.dot(x.astype(jnp.bfloat16), w1, preferred_element_type=jnp.float32) + p["b1"]
    h = jnp.maximum(h, 0.0)
    h = jnp.dot(h.astype(jnp.bfloat16), w2, preferred_element_type=jnp.float32) + p["b2"]
    h = jnp.maximum(h, 0.0)
    return jnp.sum(h * p["w3"].reshape(1, -1), axis=-1, keepdims=True) + p["b3"]


def _reference_f32(x, p):
    h = jnp.maximum(x @ p["w1"] + p["b1"], 0.0)
    h = jnp.maximum(h @ p["w2"] + p["b2"], 0.0)
    return h @ p["w3"] + p["b3"]


if __name__ == "__main__":
    key = jax.random.PRNGKey(0)
    kx, kx2, kp = jax.random.split(key, 3)
    params = init_params(kp)

    # Case A: small batch, single ragged block (default tile path).
    B_a = 40
    x_a = jax.random.normal(kx, (B_a, D_IN), dtype=jnp.float32)
    out_a = jax.block_until_ready(mapping_model_forward(x_a, params))
    # Case B: same batch, tiny tile -> multi-step grid with a ragged tail block.
    out_b = jax.block_until_ready(mapping_model_forward(x_a, params, tile_b=16))
    # Case C: batch > 256 -> large-batch path (tile multiple of 256, >= 2 grid steps).
    B_c = 288
    x_c = jax.random.normal(kx2, (B_c, D_IN), dtype=jnp.float32)
    out_c = jax.block_until_ready(mapping_model_forward(x_c, params))

    ref_a = _reference_bf16(x_a, params)
    ref_c = _reference_bf16(x_c, params)
    ref_a_f32 = _reference_f32(x_a, params)

    assert out_a.shape == (B_a, 1) and out_b.shape == (B_a, 1) and out_c.shape == (B_c, 1)
    # Tight checks against a reference with matching bf16 quantization.
    assert jnp.allclose(out_a, ref_a, atol=1e-2, rtol=1e-2), \
        float(jnp.max(jnp.abs(out_a - ref_a)))
    assert jnp.allclose(out_b, ref_a, atol=1e-2, rtol=1e-2), \
        float(jnp.max(jnp.abs(out_b - ref_a)))
    assert jnp.allclose(out_c, ref_c, atol=1e-2, rtol=1e-2), \
        float(jnp.max(jnp.abs(out_c - ref_c)))
    # Loose sanity check against the full-f32 reference (bf16 matmul error budget).
    assert jnp.allclose(out_a, ref_a_f32, atol=2.0, rtol=0.05), \
        float(jnp.max(jnp.abs(out_a - ref_a_f32)))

    print("KERNEL_OK")
</pallas_src>

<mosaic_0001>
module attributes {stable_mosaic.version = 11 : i64} {
  func.func @_mlp_kernel(%arg0: i32, %arg1: memref<40x768xf32, #tpu.memory_space<vmem>>, %arg2: memref<768x384xbf16, #tpu.memory_space<vmem>>, %arg3: memref<1x384xf32, #tpu.memory_space<vmem>>, %arg4: memref<384x192xbf16, #tpu.memory_space<vmem>>, %arg5: memref<1x192xf32, #tpu.memory_space<vmem>>, %arg6: memref<1x192xf32, #tpu.memory_space<vmem>>, %arg7: memref<1x1xf32, #tpu.memory_space<vmem>>, %arg8: memref<40x1xf32, #tpu.memory_space<vmem>>) attributes {dimension_semantics = [#tpu.dimension_semantics<parallel>], iteration_bounds = array<i64: 1>, scalar_prefetch = 0 : i64, scratch_operands = 0 : i64, tpu.core_type = #tpu.core_type<tc>, window_params = [{transform_indices = @transform_0, window_bounds = array<i64: 40, 768>}, {pipeline_mode = #tpu.pipeline_mode<synchronous>, transform_indices = @transform_1, window_bounds = array<i64: 768, 384>}, {pipeline_mode = #tpu.pipeline_mode<synchronous>, transform_indices = @transform_2, window_bounds = array<i64: 1, 384>}, {pipeline_mode = #tpu.pipeline_mode<synchronous>, transform_indices = @transform_3, window_bounds = array<i64: 384, 192>}, {pipeline_mode = #tpu.pipeline_mode<synchronous>, transform_indices = @transform_4, window_bounds = array<i64: 1, 192>}, {pipeline_mode = #tpu.pipeline_mode<synchronous>, transform_indices = @transform_5, window_bounds = array<i64: 1, 192>}, {pipeline_mode = #tpu.pipeline_mode<synchronous>, transform_indices = @transform_6, window_bounds = array<i64: 1, 1>}, {transform_indices = @transform_7, window_bounds = array<i64: 40, 1>}]} {
    %c0 = arith.constant 0 : index
    %c0_0 = arith.constant 0 : index
    %0 = vector.load %arg1[%c0, %c0_0] : memref<40x768xf32, #tpu.memory_space<vmem>>, vector<40x768xf32>
    %1 = arith.truncf %0 : vector<40x768xf32> to vector<40x768xbf16>
    %c0_1 = arith.constant 0 : index
    %c0_2 = arith.constant 0 : index
    %2 = vector.load %arg2[%c0_1, %c0_2] : memref<768x384xbf16, #tpu.memory_space<vmem>>, vector<768x384xbf16>
    %cst = arith.constant dense<0.000000e+00> : vector<40x384xf32>
    %3 = tpu.matmul %1, %2, %cst {dimension_numbers = #tpu.dot_dimension_numbers<[1], [0], [0], [1], [0, 0, 1, 1], [], []>} : vector<40x768xbf16>, vector<768x384xbf16>, vector<40x384xf32> -> vector<40x384xf32>
    %c0_3 = arith.constant 0 : index
    %c0_4 = arith.constant 0 : index
    %4 = vector.load %arg3[%c0_3, %c0_4] : memref<1x384xf32, #tpu.memory_space<vmem>>, vector<1x384xf32>
    %5 = vector.broadcast %4 : vector<1x384xf32> to vector<40x384xf32>
    %6 = arith.addf %3, %5 : vector<40x384xf32>
    %cst_5 = arith.constant 0.000000e+00 : f32
    %7 = vector.broadcast %cst_5 : f32 to vector<40x384xf32>
    %8 = arith.maximumf %6, %7 : vector<40x384xf32>
    %9 = arith.truncf %8 : vector<40x384xf32> to vector<40x384xbf16>
    %c0_6 = arith.constant 0 : index
    %c0_7 = arith.constant 0 : index
    %10 = vector.load %arg4[%c0_6, %c0_7] : memref<384x192xbf16, #tpu.memory_space<vmem>>, vector<384x192xbf16>
    %cst_8 = arith.constant dense<0.000000e+00> : vector<40x192xf32>
    %11 = tpu.matmul %9, %10, %cst_8 {dimension_numbers = #tpu.dot_dimension_numbers<[1], [0], [0], [1], [0, 0, 1, 1], [], []>} : vector<40x384xbf16>, vector<384x192xbf16>, vector<40x192xf32> -> vector<40x192xf32>
    %c0_9 = arith.constant 0 : index
    %c0_10 = arith.constant 0 : index
    %12 = vector.load %arg5[%c0_9, %c0_10] : memref<1x192xf32, #tpu.memory_space<vmem>>, vector<1x192xf32>
    %13 = vector.broadcast %12 : vector<1x192xf32> to vector<40x192xf32>
    %14 = arith.addf %11, %13 : vector<40x192xf32>
    %cst_11 = arith.constant 0.000000e+00 : f32
    %15 = vector.broadcast %cst_11 : f32 to vector<40x192xf32>
    %16 = arith.maximumf %14, %15 : vector<40x192xf32>
    %c0_12 = arith.constant 0 : index
    %c0_13 = arith.constant 0 : index
    %17 = vector.load %arg6[%c0_12, %c0_13] : memref<1x192xf32, #tpu.memory_space<vmem>>, vector<1x192xf32>
    %18 = vector.broadcast %17 : vector<1x192xf32> to vector<40x192xf32>
    %19 = arith.mulf %16, %18 : vector<40x192xf32>
    %cst_14 = arith.constant dense<0.000000e+00> : vector<40xf32>
    %20 = vector.multi_reduction <add>, %19, %cst_14 [1] : vector<40x192xf32> to vector<40xf32>
    %21 = vector.shape_cast %20 : vector<40xf32> to vector<40x1xf32>
    %c0_15 = arith.constant 0 : index
    %c0_16 = arith.constant 0 : index
    %22 = vector.load %arg7[%c0_15, %c0_16] : memref<1x1xf32, #tpu.memory_space<vmem>>, vector<1x1xf32>
    %23 = vector.broadcast %22 : vector<1x1xf32> to vector<40x1xf32>
    %24 = arith.addf %21, %23 : vector<40x1xf32>
    %c0_17 = arith.constant 0 : index
    %c0_18 = arith.constant 0 : index
    %25 = vector.load %arg8[%c0_17, %c0_18] : memref<40x1xf32, #tpu.memory_space<vmem>>, vector<40x1xf32>
    tpu.vector_store %arg8[%c0_17, %c0_18], %24 {strides = array<i32>} : memref<40x1xf32, #tpu.memory_space<vmem>>, vector<40x1xf32>,
    return
  }
  func.func @transform_0(%arg0: i32) -> (i32, i32) {
    %c0_i32 = arith.constant 0 : i32
    %c0_i32_0 = arith.constant 0 : i32
    return %arg0, %c0_i32 : i32, i32
  }
  func.func @transform_1(%arg0: i32) -> (i32, i32) {
    %c0_i32 = arith.constant 0 : i32
    %c0_i32_0 = arith.constant 0 : i32
    %c0_i32_1 = arith.constant 0 : i32
    return %c0_i32, %c0_i32_0 : i32, i32
  }
  func.func @transform_2(%arg0: i32) -> (i32, i32) {
    %c0_i32 = arith.constant 0 : i32
    %c0_i32_0 = arith.constant 0 : i32
    %c0_i32_1 = arith.constant 0 : i32
    return %c0_i32, %c0_i32_0 : i32, i32
  }
  func.func @transform_3(%arg0: i32) -> (i32, i32) {
    %c0_i32 = arith.constant 0 : i32
    %c0_i32_0 = arith.constant 0 : i32
    %c0_i32_1 = arith.constant 0 : i32
    return %c0_i32, %c0_i32_0 : i32, i32
  }
  func.func @transform_4(%arg0: i32) -> (i32, i32) {
    %c0_i32 = arith.constant 0 : i32
    %c0_i32_0 = arith.constant 0 : i32
    %c0_i32_1 = arith.constant 0 : i32
    return %c0_i32, %c0_i32_0 : i32, i32
  }
  func.func @transform_5(%arg0: i32) -> (i32, i32) {
    %c0_i32 = arith.constant 0 : i32
    %c0_i32_0 = arith.constant 0 : i32
    %c0_i32_1 = arith.constant 0 : i32
    return %c0_i32, %c0_i32_0 : i32, i32
  }
  func.func @transform_6(%arg0: i32) -> (i32, i32) {
    %c0_i32 = arith.constant 0 : i32
    %c0_i32_0 = arith.constant 0 : i32
    %c0_i32_1 = arith.constant 0 : i32
    return %c0_i32, %c0_i32_0 : i32, i32
  }
  func.func @transform_7(%arg0: i32) -> (i32, i32) {
    %c0_i32 = arith.constant 0 : i32
    %c0_i32_0 = arith.constant 0 : i32
    return %arg0, %c0_i32 : i32, i32
  }
}

</mosaic_0001>

<llo_original>
// kernel: tpu_custom_call.1
$region0: #{tpu_custom_call.1}
  #allocation0 [shape = 'u32[]', space=smem, size = 0x4, offset = 0x4, fixed_abs, tag = 'smem constant byte address 0x4 - core index']
  #allocation1 [shape = 'u32[144,128]{1,0:T(1,128)}', space=vmem, size = 0x12000, scoped, tag = 'internal scratch']
  #allocation2 [shape = 'f32[1,1]{1,0:T(1,128)S(1)}', space=vmem, size = 0x200, scoped, tag = 'scoped memory for tpu_custom_call.1']
  %s0 = inlined_call_operand.vmem [shape: f32[40,768], index: 0, kind: input, shape index: {}]
  %s1 = inlined_call_operand.hbm [shape: bf16[768,384], index: 1, kind: input, shape index: {}]
  %s2 = inlined_call_operand.vmem [shape: f32[1,384], index: 2, kind: input, shape index: {}]
  %s3 = inlined_call_operand.vmem [shape: bf16[384,192], index: 3, kind: input, shape index: {}]
  %s4 = inlined_call_operand.vmem [shape: f32[1,192], index: 4, kind: input, shape index: {}]
  %s5 = inlined_call_operand.vmem [shape: f32[1,192], index: 5, kind: input, shape index: {}]
  %s6 = inlined_call_operand.<no memory space> [shape: f32[1,1], index: 6, kind: input, shape index: {}]
  %s7 = inlined_call_operand.vmem [shape: f32[40,1], index: 7, kind: output, shape index: {}]
  %s8 = sld [smem:[#allocation0]]
  $region42: #{tpu_custom_call.1} parent=0
    _
  %s10 = ssub.s32 1, %s8
  %s11 = scalar_select 0, %s10, %s8
  %v12 = vstv %s6
  %13 = vst [vmem:[#allocation2] sm:$0x1] %v12
  $region1: #{tpu_custom_call.1} parent=0
    #allocation3 [shape = 'u8[589824]{0}', space=vmem, size = 0x90000, scoped, tag = 'input window, operand 1, single buffered']
    #allocation4 [shape = 's32[1]{0}', space=sflag, size = 0x4, scoped, tag = 'scoped memory for tpu_custom_call.1']
    %14 = vsyncpa [#allocation4], 0
    // Predicated region
    $region2: #{tpu_custom_call.1} parent=1 // pred_check
      _
    $region3: #{tpu_custom_call.1} parent=1 // pred_check_branch
      %16 = sbr.rel (0) target = $region5
    $region4: #{tpu_custom_call.1} parent=1 // pred_region
      _
    $region5: #{tpu_custom_call.1} parent=1 // pred_fallthru
      _
    // Predicated region
    $region6: #{tpu_custom_call.1} parent=1 // pred_check
      _
    $region7: #{tpu_custom_call.1} parent=1 // pred_check_branch
      %18 = sbr.rel (0) target = $region9
    $region8: #{tpu_custom_call.1} parent=1 // pred_region
      %s20 = ssub.s32 18432, 18432
      %21 = vsyncadd [#allocation4], %s20
      %s22 = sshll.u32 [#allocation3], 4
      %s23 = int_to_ptr.vmem [resolvable:$true] %s22
      %28 = dma.hbm_to_vmem [thread:$0]  %s1, 18432, %s23, [#allocation4], 192, 192, 12
    $region9: #{tpu_custom_call.1} parent=1 // pred_fallthru
      _
    // Predicated region
    $region10: #{tpu_custom_call.1} parent=1 // pred_check
      _
    $region11: #{tpu_custom_call.1} parent=1 // pred_check_branch
      %30 = sbr.rel (0) target = $region13
    $region12: #{tpu_custom_call.1} parent=1 // pred_region
      _
    $region13: #{tpu_custom_call.1} parent=1 // pred_fallthru
      _
    // Predicated region
    $region14: #{tpu_custom_call.1} parent=1 // pred_check
      _
    $region15: #{tpu_custom_call.1} parent=1 // pred_check_branch
      %32 = sbr.rel (0) target = $region17
    $region16: #{tpu_custom_call.1} parent=1 // pred_region
      _
    $region17: #{tpu_custom_call.1} parent=1 // pred_fallthru
      _
    // Predicated region
    $region18: #{tpu_custom_call.1} parent=1 // pred_check
      _
    $region19: #{tpu_custom_call.1} parent=1 // pred_check_branch
      %34 = sbr.rel (0) target = $region21
    $region20: #{tpu_custom_call.1} parent=1 // pred_region
      _
    $region21: #{tpu_custom_call.1} parent=1 // pred_fallthru
      _
    // Predicated region
    $region22: #{tpu_custom_call.1} parent=1 // pred_check
      _
    $region23: #{tpu_custom_call.1} parent=1 // pred_check_branch
      %36 = sbr.rel (0) target = $region25
    $region24: #{tpu_custom_call.1} parent=1 // pred_region
      _
    $region25: #{tpu_custom_call.1} parent=1 // pred_fallthru
      _
    // Predicated region
    $region26: #{tpu_custom_call.1} parent=1 // pred_check
      _
    $region27: #{tpu_custom_call.1} parent=1 // pred_check_branch
      %38 = sbr.rel (0) target = $region29
    $region28: #{tpu_custom_call.1} parent=1 // pred_region
      _
    $region29: #{tpu_custom_call.1} parent=1 // pred_fallthru
      _
    // Predicated region
    $region30: #{tpu_custom_call.1} parent=1 // pred_check
      _
    $region31: #{tpu_custom_call.1} parent=1 // pred_check_branch
      %40 = sbr.rel (0) target = $region33
    $region32: #{tpu_custom_call.1} parent=1 // pred_region
      %41 = dma.done [#allocation4], 18432
    $region33: #{tpu_custom_call.1} parent=1 // pred_fallthru
      _
    %v43 = vld [vmem:[%s0] sm:$0xff]
    %v44 = vld [vmem:[%s0 + $0x8] sm:$0xff]
    %v45 = vld [vmem:[%s0 + $0x10] sm:$0xff]
    %v46 = vld [vmem:[%s0 + $0x18] sm:$0xff]
    %v47 = vld [vmem:[%s0 + $0x20] sm:$0xff]
    %v48 = vld [vmem:[%s0 + $0x28] sm:$0xff]
    %v49 = vld [vmem:[%s0 + $0x30] sm:$0xff]
    %v50 = vld [vmem:[%s0 + $0x38] sm:$0xff]
    %v51 = vld [vmem:[%s0 + $0x40] sm:$0xff]
    %v52 = vld [vmem:[%s0 + $0x48] sm:$0xff]
    %v53 = vld [vmem:[%s0 + $0x50] sm:$0xff]
    %v54 = vld [vmem:[%s0 + $0x58] sm:$0xff]
    %v55 = vld [vmem:[%s0 + $0x60] sm:$0xff]
    %v56 = vld [vmem:[%s0 + $0x68] sm:$0xff]
    %v57 = vld [vmem:[%s0 + $0x70] sm:$0xff]
    %v58 = vld [vmem:[%s0 + $0x78] sm:$0xff]
    %v59 = vld [vmem:[%s0 + $0x80] sm:$0xff]
    %v60 = vld [vmem:[%s0 + $0x88] sm:$0xff]
    %v61 = vld [vmem:[%s0 + $0x90] sm:$0xff]
    %v62 = vld [vmem:[%s0 + $0x98] sm:$0xff]
    %v63 = vld [vmem:[%s0 + $0xa0] sm:$0xff]
    %v64 = vld [vmem:[%s0 + $0xa8] sm:$0xff]
    %v65 = vld [vmem:[%s0 + $0xb0] sm:$0xff]
    %v66 = vld [vmem:[%s0 + $0xb8] sm:$0xff]
    %v67 = vld [vmem:[%s0 + $0xc0] sm:$0xff]
    %v68 = vld [vmem:[%s0 + $0xc8] sm:$0xff]
    %v69 = vld [vmem:[%s0 + $0xd0] sm:$0xff]
    %v70 = vld [vmem:[%s0 + $0xd8] sm:$0xff]
    %v71 = vld [vmem:[%s0 + $0xe0] sm:$0xff]
    %v72 = vld [vmem:[%s0 + $0xe8] sm:$0xff]
    %v73 = vpack.c.bf16 %v49, %v43
    %v74 = vpack.c.bf16 %v50, %v44
    %v75 = vpack.c.bf16 %v51, %v45
    %v76 = vpack.c.bf16 %v52, %v46
    %v77 = vpack.c.bf16 %v53, %v47
    %v78 = vpack.c.bf16 %v54, %v48
    %v79 = vpack.c.bf16 %v61, %v55
    %v80 = vpack.c.bf16 %v62, %v56
    %v81 = vpack.c.bf16 %v63, %v57
    %v82 = vpack.c.bf16 %v64, %v58
    %v83 = vpack.c.bf16 %v65, %v59
    %v84 = vpack.c.bf16 %v66, %v60
    %v85 = vpack.c.bf16 %v67, %v67
    %v86 = vpack.c.bf16 %v68, %v68
    %v87 = vpack.c.bf16 %v69, %v69
    %v88 = vpack.c.bf16 %v70, %v70
    %v89 = vpack.c.bf16 %v71, %v71
    %v90 = vpack.c.bf16 %v72, %v72
    %v91 = vld [vmem:[#allocation3] sm:$0xff]
    %v92 = vld [vmem:[#allocation3 + $0x8] sm:$0xf]
    %v93 = vld [vmem:[#allocation3 + $0xc] sm:$0xff]
    %v94 = vld [vmem:[#allocation3 + $0x14] sm:$0xf]
    %v95 = vld [vmem:[#allocation3 + $0x18] sm:$0xff]
    %v96 = vld [vmem:[#allocation3 + $0x20] sm:$0xf]
    %v97 = vld [vmem:[#allocation3 + $0x24] sm:$0xff]
    %v98 = vld [vmem:[#allocation3 + $0x2c] sm:$0xf]
    %v99 = vld [vmem:[#allocation3 + $0x30] sm:$0xff]
    %v100 = vld [vmem:[#allocation3 + $0x38] sm:$0xf]
    %v101 = vld [vmem:[#allocation3 + $0x3c] sm:$0xff]
    %v102 = vld [vmem:[#allocation3 + $0x44] sm:$0xf]
    %v103 = vld [vmem:[#allocation3 + $0x48] sm:$0xff]
    %v104 = vld [vmem:[#allocation3 + $0x50] sm:$0xf]
    %v105 = vld [vmem:[#allocation3 + $0x54] sm:$0xff]
    %v106 = vld [vmem:[#allocation3 + $0x5c] sm:$0xf]
    %v107 = vld [vmem:[#allocation3 + $0x60] sm:$0xff]
    %v108 = vld [vmem:[#allocation3 + $0x68] sm:$0xf]
    %v109 = vld [vmem:[#allocation3 + $0x6c] sm:$0xff]
    %v110 = vld [vmem:[#allocation3 + $0x74] sm:$0xf]
    %v111 = vld [vmem:[#allocation3 + $0x78] sm:$0xff]
    %v112 = vld [vmem:[#allocation3 + $0x80] sm:$0xf]
    %v113 = vld [vmem:[#allocation3 + $0x84] sm:$0xff]
    %v114 = vld [vmem:[#allocation3 + $0x8c] sm:$0xf]
    %v115 = vld [vmem:[#allocation3 + $0x90] sm:$0xff]
    %v116 = vld [vmem:[#allocation3 + $0x98] sm:$0xf]
    %v117 = vld [vmem:[#allocation3 + $0x9c] sm:$0xff]
    %v118 = vld [vmem:[#allocation3 + $0xa4] sm:$0xf]
    %v119 = vld [vmem:[#allocation3 + $0xa8] sm:$0xff]
    %v120 = vld [vmem:[#allocation3 + $0xb0] sm:$0xf]
    %v121 = vld [vmem:[#allocation3 + $0xb4] sm:$0xff]
    %v122 = vld [vmem:[#allocation3 + $0xbc] sm:$0xf]
    %v123 = vld [vmem:[#allocation3 + $0xc0] sm:$0xff]
    %v124 = vld [vmem:[#allocation3 + $0xc8] sm:$0xf]
    %v125 = vld [vmem:[#allocation3 + $0xcc] sm:$0xff]
    %v126 = vld [vmem:[#allocation3 + $0xd4] sm:$0xf]
    %v127 = vld [vmem:[#allocation3 + $0xd8] sm:$0xff]
    %v128 = vld [vmem:[#allocation3 + $0xe0] sm:$0xf]
    %v129 = vld [vmem:[#allocation3 + $0xe4] sm:$0xff]
    %v130 = vld [vmem:[#allocation3 + $0xec] sm:$0xf]
    %v131 = vld [vmem:[#allocation3 + $0xf0] sm:$0xff]
    %v132 = vld [vmem:[#allocation3 + $0xf8] sm:$0xf]
    %v133 = vld [vmem:[#allocation3 + $0xfc] sm:$0xff]
    %v134 = vld [vmem:[#allocation3 + $0x104] sm:$0xf]
    %v135 = vld [vmem:[#allocation3 + $0x108] sm:$0xff]
    %v136 = vld [vmem:[#allocation3 + $0x110] sm:$0xf]
    %v137 = vld [vmem:[#allocation3 + $0x114] sm:$0xff]
    %v138 = vld [vmem:[#allocation3 + $0x11c] sm:$0xf]
    %v139 = vld [vmem:[#allocation3 + $0x120] sm:$0xff]
    %v140 = vld [vmem:[#allocation3 + $0x128] sm:$0xf]
    %v141 = vld [vmem:[#allocation3 + $0x12c] sm:$0xff]
    %v142 = vld [vmem:[#allocation3 + $0x134] sm:$0xf]
    %v143 = vld [vmem:[#allocation3 + $0x138] sm:$0xff]
    %v144 = vld [vmem:[#allocation3 + $0x140] sm:$0xf]
    %v145 = vld [vmem:[#allocation3 + $0x144] sm:$0xff]
    %v146 = vld [vmem:[#allocation3 + $0x14c] sm:$0xf]
    %v147 = vld [vmem:[#allocation3 + $0x150] sm:$0xff]
    %v148 = vld [vmem:[#allocation3 + $0x158] sm:$0xf]
    %v149 = vld [vmem:[#allocation3 + $0x15c] sm:$0xff]
    %v150 = vld [vmem:[#allocation3 + $0x164] sm:$0xf]
    %v151 = vld [vmem:[#allocation3 + $0x168] sm:$0xff]
    %v152 = vld [vmem:[#allocation3 + $0x170] sm:$0xf]
    %v153 = vld [vmem:[#allocation3 + $0x174] sm:$0xff]
    %v154 = vld [vmem:[#allocation3 + $0x17c] sm:$0xf]
    %v155 = vld [vmem:[#allocation3 + $0x180] sm:$0xff]
    %v156 = vld [vmem:[#allocation3 + $0x188] sm:$0xf]
    %v157 = vld [vmem:[#allocation3 + $0x18c] sm:$0xff]
    %v158 = vld [vmem:[#allocation3 + $0x194] sm:$0xf]
    %v159 = vld [vmem:[#allocation3 + $0x198] sm:$0xff]
    %v160 = vld [vmem:[#allocation3 + $0x1a0] sm:$0xf]
    %v161 = vld [vmem:[#allocation3 + $0x1a4] sm:$0xff]
    %v162 = vld [vmem:[#allocation3 + $0x1ac] sm:$0xf]
    %v163 = vld [vmem:[#allocation3 + $0x1b0] sm:$0xff]
    %v164 = vld [vmem:[#allocation3 + $0x1b8] sm:$0xf]
    %v165 = vld [vmem:[#allocation3 + $0x1bc] sm:$0xff]
    %v166 = vld [vmem:[#allocation3 + $0x1c4] sm:$0xf]
    %v167 = vld [vmem:[#allocation3 + $0x1c8] sm:$0xff]
    %v168 = vld [vmem:[#allocation3 + $0x1d0] sm:$0xf]
    %v169 = vld [vmem:[#allocation3 + $0x1d4] sm:$0xff]
    %v170 = vld [vmem:[#allocation3 + $0x1dc] sm:$0xf]
    %v171 = vld [vmem:[#allocation3 + $0x1e0] sm:$0xff]
    %v172 = vld [vmem:[#allocation3 + $0x1e8] sm:$0xf]
    %v173 = vld [vmem:[#allocation3 + $0x1ec] sm:$0xff]
    %v174 = vld [vmem:[#allocation3 + $0x1f4] sm:$0xf]
    %v175 = vld [vmem:[#allocation3 + $0x1f8] sm:$0xff]
    %v176 = vld [vmem:[#allocation3 + $0x200] sm:$0xf]
    %v177 = vld [vmem:[#allocation3 + $0x204] sm:$0xff]
    %v178 = vld [vmem:[#allocation3 + $0x20c] sm:$0xf]
    %v179 = vld [vmem:[#allocation3 + $0x210] sm:$0xff]
    %v180 = vld [vmem:[#allocation3 + $0x218] sm:$0xf]
    %v181 = vld [vmem:[#allocation3 + $0x21c] sm:$0xff]
    %v182 = vld [vmem:[#allocation3 + $0x224] sm:$0xf]
    %v183 = vld [vmem:[#allocation3 + $0x228] sm:$0xff]
    %v184 = vld [vmem:[#allocation3 + $0x230] sm:$0xf]
    %v185 = vld [vmem:[#allocation3 + $0x234] sm:$0xff]
    %v186 = vld [vmem:[#allocation3 + $0x23c] sm:$0xf]
    %v187 = vld [vmem:[#allocation3 + $0x240] sm:$0xff]
    %v188 = vld [vmem:[#allocation3 + $0x248] sm:$0xf]
    %v189 = vld [vmem:[#allocation3 + $0x24c] sm:$0xff]
    %v190 = vld [vmem:[#allocation3 + $0x254] sm:$0xf]
    %v191 = vld [vmem:[#allocation3 + $0x258] sm:$0xff]
    %v192 = vld [vmem:[#allocation3 + $0x260] sm:$0xf]
    %v193 = vld [vmem:[#allocation3 + $0x264] sm:$0xff]
    %v194 = vld [vmem:[#allocation3 + $0x26c] sm:$0xf]
    %v195 = vld [vmem:[#allocation3 + $0x270] sm:$0xff]
    %v196 = vld [vmem:[#allocation3 + $0x278] sm:$0xf]
    %v197 = vld [vmem:[#allocation3 + $0x27c] sm:$0xff]
    %v198 = vld [vmem:[#allocation3 + $0x284] sm:$0xf]
    %v199 = vld [vmem:[#allocation3 + $0x288] sm:$0xff]
    %v200 = vld [vmem:[#allocation3 + $0x290] sm:$0xf]
    %v201 = vld [vmem:[#allocation3 + $0x294] sm:$0xff]
    %v202 = vld [vmem:[#allocation3 + $0x29c] sm:$0xf]
    %v203 = vld [vmem:[#allocation3 + $0x2a0] sm:$0xff]
    %v204 = vld [vmem:[#allocation3 + $0x2a8] sm:$0xf]
    %v205 = vld [vmem:[#allocation3 + $0x2ac] sm:$0xff]
    %v206 = vld [vmem:[#allocation3 + $0x2b4] sm:$0xf]
    %v207 = vld [vmem:[#allocation3 + $0x2b8] sm:$0xff]
    %v208 = vld [vmem:[#allocation3 + $0x2c0] sm:$0xf]
    %v209 = vld [vmem:[#allocation3 + $0x2c4] sm:$0xff]
    %v210 = vld [vmem:[#allocation3 + $0x2cc] sm:$0xf]
    %v211 = vld [vmem:[#allocation3 + $0x2d0] sm:$0xff]
    %v212 = vld [vmem:[#allocation3 + $0x2d8] sm:$0xf]
    %v213 = vld [vmem:[#allocation3 + $0x2dc] sm:$0xff]
    %v214 = vld [vmem:[#allocation3 + $0x2e4] sm:$0xf]
    %v215 = vld [vmem:[#allocation3 + $0x2e8] sm:$0xff]
    %v216 = vld [vmem:[#allocation3 + $0x2f0] sm:$0xf]
    %v217 = vld [vmem:[#allocation3 + $0x2f4] sm:$0xff]
    %v218 = vld [vmem:[#allocation3 + $0x2fc] sm:$0xf]
    %v219 = vld [vmem:[#allocation3 + $0x300] sm:$0xff]
    %v220 = vld [vmem:[#allocation3 + $0x308] sm:$0xf]
    %v221 = vld [vmem:[#allocation3 + $0x30c] sm:$0xff]
    %v222 = vld [vmem:[#allocation3 + $0x314] sm:$0xf]
    %v223 = vld [vmem:[#allocation3 + $0x318] sm:$0xff]
    %v224 = vld [vmem:[#allocation3 + $0x320] sm:$0xf]
    %v225 = vld [vmem:[#allocation3 + $0x324] sm:$0xff]
    %v226 = vld [vmem:[#allocation3 + $0x32c] sm:$0xf]
    %v227 = vld [vmem:[#allocation3 + $0x330] sm:$0xff]
    %v228 = vld [vmem:[#allocation3 + $0x338] sm:$0xf]
    %v229 = vld [vmem:[#allocation3 + $0x33c] sm:$0xff]
    %v230 = vld [vmem:[#allocation3 + $0x344] sm:$0xf]
    %v231 = vld [vmem:[#allocation3 + $0x348] sm:$0xff]
    %v232 = vld [vmem:[#allocation3 + $0x350] sm:$0xf]
    %v233 = vld [vmem:[#allocation3 + $0x354] sm:$0xff]
    %v234 = vld [vmem:[#allocation3 + $0x35c] sm:$0xf]
    %v235 = vld [vmem:[#allocation3 + $0x360] sm:$0xff]
    %v236 = vld [vmem:[#allocation3 + $0x368] sm:$0xf]
    %v237 = vld [vmem:[#allocation3 + $0x36c] sm:$0xff]
    %v238 = vld [vmem:[#allocation3 + $0x374] sm:$0xf]
    %v239 = vld [vmem:[#allocation3 + $0x378] sm:$0xff]
    %v240 = vld [vmem:[#allocation3 + $0x380] sm:$0xf]
    %v241 = vld [vmem:[#allocation3 + $0x384] sm:$0xff]
    %v242 = vld [vmem:[#allocation3 + $0x38c] sm:$0xf]
    %v243 = vld [vmem:[#allocation3 + $0x390] sm:$0xff]
    %v244 = vld [vmem:[#allocation3 + $0x398] sm:$0xf]
    %v245 = vld [vmem:[#allocation3 + $0x39c] sm:$0xff]
    %v246 = vld [vmem:[#allocation3 + $0x3a4] sm:$0xf]
    %v247 = vld [vmem:[#allocation3 + $0x3a8] sm:$0xff]
    %v248 = vld [vmem:[#allocation3 + $0x3b0] sm:$0xf]
    %v249 = vld [vmem:[#allocation3 + $0x3b4] sm:$0xff]
    %v250 = vld [vmem:[#allocation3 + $0x3bc] sm:$0xf]
    %v251 = vld [vmem:[#allocation3 + $0x3c0] sm:$0xff]
    %v252 = vld [vmem:[#allocation3 + $0x3c8] sm:$0xf]
    %v253 = vld [vmem:[#allocation3 + $0x3cc] sm:$0xff]
    %v254 = vld [vmem:[#allocation3 + $0x3d4] sm:$0xf]
    %v255 = vld [vmem:[#allocation3 + $0x3d8] sm:$0xff]
    %v256 = vld [vmem:[#allocation3 + $0x3e0] sm:$0xf]
    %v257 = vld [vmem:[#allocation3 + $0x3e4] sm:$0xff]
    %v258 = vld [vmem:[#allocation3 + $0x3ec] sm:$0xf]
    %v259 = vld [vmem:[#allocation3 + $0x3f0] sm:$0xff]
    %v260 = vld [vmem:[#allocation3 + $0x3f8] sm:$0xf]
    %v261 = vld [vmem:[#allocation3 + $0x3fc] sm:$0xff]
    %v262 = vld [vmem:[#allocation3 + $0x404] sm:$0xf]
    %v263 = vld [vmem:[#allocation3 + $0x408] sm:$0xff]
    %v264 = vld [vmem:[#allocation3 + $0x410] sm:$0xf]
    %v265 = vld [vmem:[#allocation3 + $0x414] sm:$0xff]
    %v266 = vld [vmem:[#allocation3 + $0x41c] sm:$0xf]
    %v267 = vld [vmem:[#allocation3 + $0x420] sm:$0xff]
    %v268 = vld [vmem:[#allocation3 + $0x428] sm:$0xf]
    %v269 = vld [vmem:[#allocation3 + $0x42c] sm:$0xff]
    %v270 = vld [vmem:[#allocation3 + $0x434] sm:$0xf]
    %v271 = vld [vmem:[#allocation3 + $0x438] sm:$0xff]
    %v272 = vld [vmem:[#allocation3 + $0x440] sm:$0xf]
    %v273 = vld [vmem:[#allocation3 + $0x444] sm:$0xff]
    %v274 = vld [vmem:[#allocation3 + $0x44c] sm:$0xf]
    %v275 = vld [vmem:[#allocation3 + $0x450] sm:$0xff]
    %v276 = vld [vmem:[#allocation3 + $0x458] sm:$0xf]
    %v277 = vld [vmem:[#allocation3 + $0x45c] sm:$0xff]
    %v278 = vld [vmem:[#allocation3 + $0x464] sm:$0xf]
    %v279 = vld [vmem:[#allocation3 + $0x468] sm:$0xff]
    %v280 = vld [vmem:[#allocation3 + $0x470] sm:$0xf]
    %v281 = vld [vmem:[#allocation3 + $0x474] sm:$0xff]
    %v282 = vld [vmem:[#allocation3 + $0x47c] sm:$0xf]
    %v283 = vld [vmem:[%s2] sm:$0x7]
    %v285 = vlaneseq
    %v286 = vshrl.u32 %v285, 7
    %v287 = vsub.s32 0, %v286
    %v288 = vrot.slane %v283, %v287
    %v289 = vlaneseq
    %v290 = vshrl.u32 %v289, 7
    %v291 = vsub.s32 1, %v290
    %v292 = vrot.slane %v283, %v291
    %v293 = vlaneseq
    %v294 = vshrl.u32 %v293, 7
    %v295 = vsub.s32 2, %v294
    %v296 = vrot.slane %v283, %v295
    %v492 = vunpack.c.l.b16 %v91
    %v493 = vunpack.c.h.b16 %v91
    %v494 = vunpack.c.l.b16 %v92
    %v495 = vunpack.c.l.b16 %v93
    %v496 = vunpack.c.h.b16 %v93
    %v497 = vunpack.c.l.b16 %v94
    %v498 = vunpack.c.l.b16 %v95
    %v499 = vunpack.c.h.b16 %v95
    %v500 = vunpack.c.l.b16 %v96
    %v501 = vunpack.c.l.b16 %v97
    %v502 = vunpack.c.h.b16 %v97
    %v503 = vunpack.c.l.b16 %v98
    %v504 = vunpack.c.l.b16 %v99
    %v505 = vunpack.c.h.b16 %v99
    %v506 = vunpack.c.l.b16 %v100
    %v507 = vunpack.c.l.b16 %v101
    %v508 = vunpack.c.h.b16 %v101
    %v509 = vunpack.c.l.b16 %v102
    %v510 = vunpack.c.l.b16 %v103
    %v511 = vunpack.c.h.b16 %v103
    %v512 = vunpack.c.l.b16 %v104
    %v513 = vunpack.c.l.b16 %v105
    %v514 = vunpack.c.h.b16 %v105
    %v515 = vunpack.c.l.b16 %v106
    %v516 = vunpack.c.l.b16 %v107
    %v517 = vunpack.c.h.b16 %v107
    %v518 = vunpack.c.l.b16 %v108
    %v519 = vunpack.c.l.b16 %v109
    %v520 = vunpack.c.h.b16 %v109
    %v521 = vunpack.c.l.b16 %v110
    %v522 = vunpack.c.l.b16 %v111
    %v523 = vunpack.c.h.b16 %v111
    %v524 = vunpack.c.l.b16 %v112
    %v525 = vunpack.c.l.b16 %v113
    %v526 = vunpack.c.h.b16 %v113
    %v527 = vunpack.c.l.b16 %v114
    %v528 = vunpack.c.l.b16 %v115
    %v529 = vunpack.c.h.b16 %v115
    %v530 = vunpack.c.l.b16 %v116
    %v531 = vunpack.c.l.b16 %v117
    %v532 = vunpack.c.h.b16 %v117
    %v533 = vunpack.c.l.b16 %v118
    %v534 = vunpack.c.l.b16 %v119
    %v535 = vunpack.c.h.b16 %v119
    %v536 = vunpack.c.l.b16 %v120
    %v537 = vunpack.c.l.b16 %v121
    %v538 = vunpack.c.h.b16 %v121
    %v539 = vunpack.c.l.b16 %v122
    %v540 = vunpack.c.l.b16 %v123
    %v541 = vunpack.c.h.b16 %v123
    %v542 = vunpack.c.l.b16 %v124
    %v543 = vunpack.c.l.b16 %v125
    %v544 = vunpack.c.h.b16 %v125
    %v545 = vunpack.c.l.b16 %v126
    %v546 = vunpack.c.l.b16 %v127
    %v547 = vunpack.c.h.b16 %v127
    %v548 = vunpack.c.l.b16 %v128
    %v549 = vunpack.c.l.b16 %v129
    %v550 = vunpack.c.h.b16 %v129
    %v551 = vunpack.c.l.b16 %v130
    %v552 = vunpack.c.l.b16 %v131
    %v553 = vunpack.c.h.b16 %v131
    %v554 = vunpack.c.l.b16 %v132
    %v555 = vunpack.c.l.b16 %v133
    %v556 = vunpack.c.h.b16 %v133
    %v557 = vunpack.c.l.b16 %v134
    %v558 = vunpack.c.l.b16 %v135
    %v559 = vunpack.c.h.b16 %v135
    %v560 = vunpack.c.l.b16 %v136
    %v561 = vunpack.c.l.b16 %v137
    %v562 = vunpack.c.h.b16 %v137
    %v563 = vunpack.c.l.b16 %v138
    %v564 = vunpack.c.l.b16 %v139
    %v565 = vunpack.c.h.b16 %v139
    %v566 = vunpack.c.l.b16 %v140
    %v567 = vunpack.c.l.b16 %v141
    %v568 = vunpack.c.h.b16 %v141
    %v569 = vunpack.c.l.b16 %v142
    %v570 = vunpack.c.l.b16 %v143
    %v571 = vunpack.c.h.b16 %v143
    %v572 = vunpack.c.l.b16 %v144
    %v573 = vunpack.c.l.b16 %v145
    %v574 = vunpack.c.h.b16 %v145
    %v575 = vunpack.c.l.b16 %v146
    %v576 = vunpack.c.l.b16 %v147
    %v577 = vunpack.c.h.b16 %v147
    %v578 = vunpack.c.l.b16 %v148
    %v579 = vunpack.c.l.b16 %v149
    %v580 = vunpack.c.h.b16 %v149
    %v581 = vunpack.c.l.b16 %v150
    %v582 = vunpack.c.l.b16 %v151
    %v583 = vunpack.c.h.b16 %v151
    %v584 = vunpack.c.l.b16 %v152
    %v585 = vunpack.c.l.b16 %v153
    %v586 = vunpack.c.h.b16 %v153
    %v587 = vunpack.c.l.b16 %v154
    %v588 = vunpack.c.l.b16 %v155
    %v589 = vunpack.c.h.b16 %v155
    %v590 = vunpack.c.l.b16 %v156
    %v591 = vunpack.c.l.b16 %v157
    %v592 = vunpack.c.h.b16 %v157
    %v593 = vunpack.c.l.b16 %v158
    %v594 = vunpack.c.l.b16 %v159
    %v595 = vunpack.c.h.b16 %v159
    %v596 = vunpack.c.l.b16 %v160
    %v597 = vunpack.c.l.b16 %v161
    %v598 = vunpack.c.h.b16 %v161
    %v599 = vunpack.c.l.b16 %v162
    %v600 = vunpack.c.l.b16 %v163
    %v601 = vunpack.c.h.b16 %v163
    %v602 = vunpack.c.l.b16 %v164
    %v603 = vunpack.c.l.b16 %v165
    %v604 = vunpack.c.h.b16 %v165
    %v605 = vunpack.c.l.b16 %v166
    %v606 = vunpack.c.l.b16 %v167
    %v607 = vunpack.c.h.b16 %v167
    %v608 = vunpack.c.l.b16 %v168
    %v609 = vunpack.c.l.b16 %v169
    %v610 = vunpack.c.h.b16 %v169
    %v611 = vunpack.c.l.b16 %v170
    %v612 = vunpack.c.l.b16 %v171
    %v613 = vunpack.c.h.b16 %v171
    %v614 = vunpack.c.l.b16 %v172
    %v615 = vunpack.c.l.b16 %v173
    %v616 = vunpack.c.h.b16 %v173
    %v617 = vunpack.c.l.b16 %v174
    %v618 = vunpack.c.l.b16 %v175
    %v619 = vunpack.c.h.b16 %v175
    %v620 = vunpack.c.l.b16 %v176
    %v621 = vunpack.c.l.b16 %v177
    %v622 = vunpack.c.h.b16 %v177
    %v623 = vunpack.c.l.b16 %v178
    %v624 = vunpack.c.l.b16 %v179
    %v625 = vunpack.c.h.b16 %v179
    %v626 = vunpack.c.l.b16 %v180
    %v627 = vunpack.c.l.b16 %v181
    %v628 = vunpack.c.h.b16 %v181
    %v629 = vunpack.c.l.b16 %v182
    %v630 = vunpack.c.l.b16 %v183
    %v631 = vunpack.c.h.b16 %v183
    %v632 = vunpack.c.l.b16 %v184
    %v633 = vunpack.c.l.b16 %v185
    %v634 = vunpack.c.h.b16 %v185
    %v635 = vunpack.c.l.b16 %v186
    %v636 = vunpack.c.l.b16 %v187
    %v637 = vunpack.c.h.b16 %v187
    %v638 = vunpack.c.l.b16 %v188
    %v639 = vunpack.c.l.b16 %v189
    %v640 = vunpack.c.h.b16 %v189
    %v641 = vunpack.c.l.b16 %v190
    %v642 = vunpack.c.l.b16 %v191
    %v643 = vunpack.c.h.b16 %v191
    %v644 = vunpack.c.l.b16 %v192
    %v645 = vunpack.c.l.b16 %v193
    %v646 = vunpack.c.h.b16 %v193
    %v647 = vunpack.c.l.b16 %v194
    %v648 = vunpack.c.l.b16 %v195
    %v649 = vunpack.c.h.b16 %v195
    %v650 = vunpack.c.l.b16 %v196
    %v651 = vunpack.c.l.b16 %v197
    %v652 = vunpack.c.h.b16 %v197
    %v653 = vunpack.c.l.b16 %v198
    %v654 = vunpack.c.l.b16 %v199
    %v655 = vunpack.c.h.b16 %v199
    %v656 = vunpack.c.l.b16 %v200
    %v657 = vunpack.c.l.b16 %v201
    %v658 = vunpack.c.h.b16 %v201
    %v659 = vunpack.c.l.b16 %v202
    %v660 = vunpack.c.l.b16 %v203
    %v661 = vunpack.c.h.b16 %v203
    %v662 = vunpack.c.l.b16 %v204
    %v663 = vunpack.c.l.b16 %v205
    %v664 = vunpack.c.h.b16 %v205
    %v665 = vunpack.c.l.b16 %v206
    %v666 = vunpack.c.l.b16 %v207
    %v667 = vunpack.c.h.b16 %v207
    %v668 = vunpack.c.l.b16 %v208
    %v669 = vunpack.c.l.b16 %v209
    %v670 = vunpack.c.h.b16 %v209
    %v671 = vunpack.c.l.b16 %v210
    %v672 = vunpack.c.l.b16 %v211
    %v673 = vunpack.c.h.b16 %v211
    %v674 = vunpack.c.l.b16 %v212
    %v675 = vunpack.c.l.b16 %v213
    %v676 = vunpack.c.h.b16 %v213
    %v677 = vunpack.c.l.b16 %v214
    %v678 = vunpack.c.l.b16 %v215
    %v679 = vunpack.c.h.b16 %v215
    %v680 = vunpack.c.l.b16 %v216
    %v681 = vunpack.c.l.b16 %v217
    %v682 = vunpack.c.h.b16 %v217
    %v683 = vunpack.c.l.b16 %v218
    %v684 = vunpack.c.l.b16 %v219
    %v685 = vunpack.c.h.b16 %v219
    %v686 = vunpack.c.l.b16 %v220
    %v687 = vunpack.c.l.b16 %v221
    %v688 = vunpack.c.h.b16 %v221
    %v689 = vunpack.c.l.b16 %v222
    %v690 = vunpack.c.l.b16 %v223
    %v691 = vunpack.c.h.b16 %v223
    %v692 = vunpack.c.l.b16 %v224
    %v693 = vunpack.c.l.b16 %v225
    %v694 = vunpack.c.h.b16 %v225
    %v695 = vunpack.c.l.b16 %v226
    %v696 = vunpack.c.l.b16 %v227
    %v697 = vunpack.c.h.b16 %v227
    %v698 = vunpack.c.l.b16 %v228
    %v699 = vunpack.c.l.b16 %v229
    %v700 = vunpack.c.h.b16 %v229
    %v701 = vunpack.c.l.b16 %v230
    %v702 = vunpack.c.l.b16 %v231
    %v703 = vunpack.c.h.b16 %v231
    %v704 = vunpack.c.l.b16 %v232
    %v705 = vunpack.c.l.b16 %v233
    %v706 = vunpack.c.h.b16 %v233
    %v707 = vunpack.c.l.b16 %v234
    %v708 = vunpack.c.l.b16 %v235
    %v709 = vunpack.c.h.b16 %v235
    %v710 = vunpack.c.l.b16 %v236
    %v711 = vunpack.c.l.b16 %v237
    %v712 = vunpack.c.h.b16 %v237
    %v713 = vunpack.c.l.b16 %v238
    %v714 = vunpack.c.l.b16 %v239
    %v715 = vunpack.c.h.b16 %v239
    %v716 = vunpack.c.l.b16 %v240
    %v717 = vunpack.c.l.b16 %v241
    %v718 = vunpack.c.h.b16 %v241
    %v719 = vunpack.c.l.b16 %v242
    %v720 = vunpack.c.l.b16 %v243
    %v721 = vunpack.c.h.b16 %v243
    %v722 = vunpack.c.l.b16 %v244
    %v723 = vunpack.c.l.b16 %v245
    %v724 = vunpack.c.h.b16 %v245
    %v725 = vunpack.c.l.b16 %v246
    %v726 = vunpack.c.l.b16 %v247
    %v727 = vunpack.c.h.b16 %v247
    %v728 = vunpack.c.l.b16 %v248
    %v729 = vunpack.c.l.b16 %v249
    %v730 = vunpack.c.h.b16 %v249
    %v731 = vunpack.c.l.b16 %v250
    %v732 = vunpack.c.l.b16 %v251
    %v733 = vunpack.c.h.b16 %v251
    %v734 = vunpack.c.l.b16 %v252
    %v735 = vunpack.c.l.b16 %v253
    %v736 = vunpack.c.h.b16 %v253
    %v737 = vunpack.c.l.b16 %v254
    %v738 = vunpack.c.l.b16 %v255
    %v739 = vunpack.c.h.b16 %v255
    %v740 = vunpack.c.l.b16 %v256
    %v741 = vunpack.c.l.b16 %v257
    %v742 = vunpack.c.h.b16 %v257
    %v743 = vunpack.c.l.b16 %v258
    %v744 = vunpack.c.l.b16 %v259
    %v745 = vunpack.c.h.b16 %v259
    %v746 = vunpack.c.l.b16 %v260
    %v747 = vunpack.c.l.b16 %v261
    %v748 = vunpack.c.h.b16 %v261
    %v749 = vunpack.c.l.b16 %v262
    %v750 = vunpack.c.l.b16 %v263
    %v751 = vunpack.c.h.b16 %v263
    %v752 = vunpack.c.l.b16 %v264
    %v753 = vunpack.c.l.b16 %v265
    %v754 = vunpack.c.h.b16 %v265
    %v755 = vunpack.c.l.b16 %v266
    %v756 = vunpack.c.l.b16 %v267
    %v757 = vunpack.c.h.b16 %v267
    %v758 = vunpack.c.l.b16 %v268
    %v759 = vunpack.c.l.b16 %v269
    %v760 = vunpack.c.h.b16 %v269
    %v761 = vunpack.c.l.b16 %v270
    %v762 = vunpack.c.l.b16 %v271
    %v763 = vunpack.c.h.b16 %v271
    %v764 = vunpack.c.l.b16 %v272
    %v765 = vunpack.c.l.b16 %v273
    %v766 = vunpack.c.h.b16 %v273
    %v767 = vunpack.c.l.b16 %v274
    %v768 = vunpack.c.l.b16 %v275
    %v769 = vunpack.c.h.b16 %v275
    %v770 = vunpack.c.l.b16 %v276
    %v771 = vunpack.c.l.b16 %v277
    %v772 = vunpack.c.h.b16 %v277
    %v773 = vunpack.c.l.b16 %v278
    %v774 = vunpack.c.l.b16 %v279
    %v775 = vunpack.c.h.b16 %v279
    %v776 = vunpack.c.l.b16 %v280
    %v777 = vunpack.c.l.b16 %v281
    %v778 = vunpack.c.h.b16 %v281
    %v779 = vunpack.c.l.b16 %v282
    %v780 = vpack.c.b16 %v495, %v492
    %v781 = vpack.c.b16 %v496, %v493
    %v782 = vpack.c.b16 %v497, %v494
    %v783 = vpack.c.b16 %v501, %v498
    %v784 = vpack.c.b16 %v502, %v499
    %v785 = vpack.c.b16 %v503, %v500
    %v786 = vpack.c.b16 %v507, %v504
    %v787 = vpack.c.b16 %v508, %v505
    %v788 = vpack.c.b16 %v509, %v506
    %v789 = vpack.c.b16 %v513, %v510
    %v790 = vpack.c.b16 %v514, %v511
    %v791 = vpack.c.b16 %v515, %v512
    %v792 = vpack.c.b16 %v519, %v516
    %v793 = vpack.c.b16 %v520, %v517
    %v794 = vpack.c.b16 %v521, %v518
    %v795 = vpack.c.b16 %v525, %v522
    %v796 = vpack.c.b16 %v526, %v523
    %v797 = vpack.c.b16 %v527, %v524
    %v798 = vpack.c.b16 %v531, %v528
    %v799 = vpack.c.b16 %v532, %v529
    %v800 = vpack.c.b16 %v533, %v530
    %v801 = vpack.c.b16 %v537, %v534
    %v802 = vpack.c.b16 %v538, %v535
    %v803 = vpack.c.b16 %v539, %v536
    %v804 = vpack.c.b16 %v543, %v540
    %v805 = vpack.c.b16 %v544, %v541
    %v806 = vpack.c.b16 %v545, %v542
    %v807 = vpack.c.b16 %v549, %v546
    %v808 = vpack.c.b16 %v550, %v547
    %v809 = vpack.c.b16 %v551, %v548
    %v810 = vpack.c.b16 %v555, %v552
    %v811 = vpack.c.b16 %v556, %v553
    %v812 = vpack.c.b16 %v557, %v554
    %v813 = vpack.c.b16 %v561, %v558
    %v814 = vpack.c.b16 %v562, %v559
    %v815 = vpack.c.b16 %v563, %v560
    %v816 = vpack.c.b16 %v567, %v564
    %v817 = vpack.c.b16 %v568, %v565
    %v818 = vpack.c.b16 %v569, %v566
    %v819 = vpack.c.b16 %v573, %v570
    %v820 = vpack.c.b16 %v574, %v571
    %v821 = vpack.c.b16 %v575, %v572
    %v822 = vpack.c.b16 %v579, %v576
    %v823 = vpack.c.b16 %v580, %v577
    %v824 = vpack.c.b16 %v581, %v578
    %v825 = vpack.c.b16 %v585, %v582
    %v826 = vpack.c.b16 %v586, %v583
    %v827 = vpack.c.b16 %v587, %v584
    %v828 = vpack.c.b16 %v591, %v588
    %v829 = vpack.c.b16 %v592, %v589
    %v830 = vpack.c.b16 %v593, %v590
    %v831 = vpack.c.b16 %v597, %v594
    %v832 = vpack.c.b16 %v598, %v595
    %v833 = vpack.c.b16 %v599, %v596
    %v834 = vpack.c.b16 %v603, %v600
    %v835 = vpack.c.b16 %v604, %v601
    %v836 = vpack.c.b16 %v605, %v602
    %v837 = vpack.c.b16 %v609, %v606
    %v838 = vpack.c.b16 %v610, %v607
    %v839 = vpack.c.b16 %v611, %v608
    %v840 = vpack.c.b16 %v615, %v612
    %v841 = vpack.c.b16 %v616, %v613
    %v842 = vpack.c.b16 %v617, %v614
    %v843 = vpack.c.b16 %v621, %v618
    %v844 = vpack.c.b16 %v622, %v619
    %v845 = vpack.c.b16 %v623, %v620
    %v846 = vpack.c.b16 %v627, %v624
    %v847 = vpack.c.b16 %v628, %v625
    %v848 = vpack.c.b16 %v629, %v626
    %v849 = vpack.c.b16 %v633, %v630
    %v850 = vpack.c.b16 %v634, %v631
    %v851 = vpack.c.b16 %v635, %v632
    %v852 = vpack.c.b16 %v639, %v636
    %v853 = vpack.c.b16 %v640, %v637
    %v854 = vpack.c.b16 %v641, %v638
    %v855 = vpack.c.b16 %v645, %v642
    %v856 = vpack.c.b16 %v646, %v643
    %v857 = vpack.c.b16 %v647, %v644
    %v858 = vpack.c.b16 %v651, %v648
    %v859 = vpack.c.b16 %v652, %v649
    %v860 = vpack.c.b16 %v653, %v650
    %v861 = vpack.c.b16 %v657, %v654
    %v862 = vpack.c.b16 %v658, %v655
    %v863 = vpack.c.b16 %v659, %v656
    %v864 = vpack.c.b16 %v663, %v660
    %v865 = vpack.c.b16 %v664, %v661
    %v866 = vpack.c.b16 %v665, %v662
    %v867 = vpack.c.b16 %v669, %v666
    %v868 = vpack.c.b16 %v670, %v667
    %v869 = vpack.c.b16 %v671, %v668
    %v870 = vpack.c.b16 %v675, %v672
    %v871 = vpack.c.b16 %v676, %v673
    %v872 = vpack.c.b16 %v677, %v674
    %v873 = vpack.c.b16 %v681, %v678
    %v874 = vpack.c.b16 %v682, %v679
    %v875 = vpack.c.b16 %v683, %v680
    %v876 = vpack.c.b16 %v687, %v684
    %v877 = vpack.c.b16 %v688, %v685
    %v878 = vpack.c.b16 %v689, %v686
    %v879 = vpack.c.b16 %v693, %v690
    %v880 = vpack.c.b16 %v694, %v691
    %v881 = vpack.c.b16 %v695, %v692
    %v882 = vpack.c.b16 %v699, %v696
    %v883 = vpack.c.b16 %v700, %v697
    %v884 = vpack.c.b16 %v701, %v698
    %v885 = vpack.c.b16 %v705, %v702
    %v886 = vpack.c.b16 %v706, %v703
    %v887 = vpack.c.b16 %v707, %v704
    %v888 = vpack.c.b16 %v711, %v708
    %v889 = vpack.c.b16 %v712, %v709
    %v890 = vpack.c.b16 %v713, %v710
    %v891 = vpack.c.b16 %v717, %v714
    %v892 = vpack.c.b16 %v718, %v715
    %v893 = vpack.c.b16 %v719, %v716
    %v894 = vpack.c.b16 %v723, %v720
    %v895 = vpack.c.b16 %v724, %v721
    %v896 = vpack.c.b16 %v725, %v722
    %v897 = vpack.c.b16 %v729, %v726
    %v898 = vpack.c.b16 %v730, %v727
    %v899 = vpack.c.b16 %v731, %v728
    %v900 = vpack.c.b16 %v735, %v732
    %v901 = vpack.c.b16 %v736, %v733
    %v902 = vpack.c.b16 %v737, %v734
    %v903 = vpack.c.b16 %v741, %v738
    %v904 = vpack.c.b16 %v742, %v739
    %v905 = vpack.c.b16 %v743, %v740
    %v906 = vpack.c.b16 %v747, %v744
    %v907 = vpack.c.b16 %v748, %v745
    %v908 = vpack.c.b16 %v749, %v746
    %v909 = vpack.c.b16 %v753, %v750
    %v910 = vpack.c.b16 %v754, %v751
    %v911 = vpack.c.b16 %v755, %v752
    %v912 = vpack.c.b16 %v759, %v756
    %v913 = vpack.c.b16 %v760, %v757
    %v914 = vpack.c.b16 %v761, %v758
    %v915 = vpack.c.b16 %v765, %v762
    %v916 = vpack.c.b16 %v766, %v763
    %v917 = vpack.c.b16 %v767, %v764
    %v918 = vpack.c.b16 %v771, %v768
    %v919 = vpack.c.b16 %v772, %v769
    %v920 = vpack.c.b16 %v773, %v770
    %v921 = vpack.c.b16 %v777, %v774
    %v922 = vpack.c.b16 %v778, %v775
    %v923 = vpack.c.b16 %v779, %v776
    %1068 = vmatprep.subr.bf16.mxu0 %v802
    %1069 = vmatpush1.bf16.msra.mxu0 %v801
    %1070 = vmatprep.subr.bf16.mxu0 %v799
    %1071 = vmatpush1.bf16.msra.mxu0 %v798
    %1072 = vmatprep.subr.bf16.mxu0 %v796
    %1073 = vmatpush1.bf16.msra.mxu0 %v795
    %1074 = vmatprep.subr.bf16.mxu0 %v793
    %1075 = vmatpush1.bf16.msra.mxu0 %v792
    %1076 = vmatprep.subr.bf16.mxu0 %v790
    %1077 = vmatpush1.bf16.msra.mxu0 %v789
    %1078 = vmatprep.subr.bf16.mxu0 %v787
    %1079 = vmatpush1.bf16.msra.mxu0 %v786
    %1080 = vmatprep.subr.bf16.mxu0 %v784
    %1081 = vmatpush1.bf16.msra.mxu0 %v783
    %1082 = vmatprep.subr.bf16.mxu0 %v781
    %1083 = vmatpush1.bf16.msra.mxu0 %v780
    %1084 = vmatprep.subr.bf16.mxu0 %v826
    %1085 = vmatpush2.bf16.msra.mxu0 %v825
    %1086 = vmatprep.subr.bf16.mxu0 %v823
    %1087 = vmatpush2.bf16.msra.mxu0 %v822
    %1088 = vmatprep.subr.bf16.mxu0 %v820
    %1089 = vmatpush2.bf16.msra.mxu0 %v819
    %1090 = vmatprep.subr.bf16.mxu0 %v817
    %1091 = vmatpush2.bf16.msra.mxu0 %v816
    %1092 = vmatprep.subr.bf16.mxu0 %v814
    %1093 = vmatpush2.bf16.msra.mxu0 %v813
    %1094 = vmatprep.subr.bf16.mxu0 %v811
    %1095 = vmatpush2.bf16.msra.mxu0 %v810
    %1096 = vmatprep.subr.bf16.mxu0 %v808
    %1097 = vmatpush2.bf16.msra.mxu0 %v807
    %1098 = vmatprep.subr.bf16.mxu0 %v805
    %1099 = vmatpush2.bf16.msra.mxu0 %v804
    %1100 = vmatprep.mubr.bf16.mxu0 %v74
    %1101 = vmatmul.mubr.bf16.gmra.mxu0 %v73
    %v1102 = vpop.f32.mrf.mxu0
    %v1103 = vadd.f32 %v288, %v1102
    %v1104 = vpop.f32.mrf.mxu0
    %v1105 = vadd.f32 %v292, %v1104
    %v1106 = vpop.f32.mrf.mxu0
    %v1107 = vadd.f32 %v288, %v1106
    %v1108 = vpop.f32.mrf.mxu0
    %v1109 = vadd.f32 %v292, %v1108
    %1110 = vmatprep.mubr.bf16.mxu0 %v80
    %1111 = vmatmul.mubr.bf16.gmra.mxu0 %v79
    %v1112 = vpop.f32.mrf.mxu0
    %v1113 = vadd.f32 %v288, %v1112
    %v1114 = vpop.f32.mrf.mxu0
    %v1115 = vadd.f32 %v292, %v1114
    %v1116 = vpop.f32.mrf.mxu0
    %v1117 = vadd.f32 %v288, %v1116
    %v1118 = vpop.f32.mrf.mxu0
    %v1119 = vadd.f32 %v292, %v1118
    %1120 = vmatprep.mubr.bf16.mxu0 %v86
    %1121 = vmatmul.mubr.bf16.gmra.mxu0 %v85
    %v1122 = vpop.f32.mrf.mxu0
    %v1123 = vadd.f32 %v288, %v1122
    %v1124 = vpop.f32.mrf.mxu0
    %v1125 = vadd.f32 %v292, %v1124
    %v1126 = vpop.f32.mrf.mxu0
    %v1127 = vpop.f32.mrf.mxu0
    %1128 = vdwg.mxu0
    %1129 = vmatprep.subr.bf16.mxu0 %v850
    %1130 = vmatpush1.bf16.msra.mxu0 %v849
    %1131 = vmatprep.subr.bf16.mxu0 %v847
    %1132 = vmatpush1.bf16.msra.mxu0 %v846
    %1133 = vmatprep.subr.bf16.mxu0 %v844
    %1134 = vmatpush1.bf16.msra.mxu0 %v843
    %1135 = vmatprep.subr.bf16.mxu0 %v841
    %1136 = vmatpush1.bf16.msra.mxu0 %v840
    %1137 = vmatprep.subr.bf16.mxu0 %v838
    %1138 = vmatpush1.bf16.msra.mxu0 %v837
    %1139 = vmatprep.subr.bf16.mxu0 %v835
    %1140 = vmatpush1.bf16.msra.mxu0 %v834
    %1141 = vmatprep.subr.bf16.mxu0 %v832
    %1142 = vmatpush1.bf16.msra.mxu0 %v831
    %1143 = vmatprep.subr.bf16.mxu0 %v829
    %1144 = vmatpush1.bf16.msra.mxu0 %v828
    %1145 = vmatprep.subr.bf16.mxu0 %v874
    %1146 = vmatpush2.bf16.msra.mxu0 %v873
    %1147 = vmatprep.subr.bf16.mxu0 %v871
    %1148 = vmatpush2.bf16.msra.mxu0 %v870
    %1149 = vmatprep.subr.bf16.mxu0 %v868
    %1150 = vmatpush2.bf16.msra.mxu0 %v867
    %1151 = vmatprep.subr.bf16.mxu0 %v865
    %1152 = vmatpush2.bf16.msra.mxu0 %v864
    %1153 = vmatprep.subr.bf16.mxu0 %v862
    %1154 = vmatpush2.bf16.msra.mxu0 %v861
    %1155 = vmatprep.subr.bf16.mxu0 %v859
    %1156 = vmatpush2.bf16.msra.mxu0 %v858
    %1157 = vmatprep.subr.bf16.mxu0 %v856
    %1158 = vmatpush2.bf16.msra.mxu0 %v855
    %1159 = vmatprep.subr.bf16.mxu0 %v853
    %1160 = vmatpush2.bf16.msra.mxu0 %v852
    %1161 = vmatprep.mubr.bf16.mxu0 %v76
    %1162 = vmatmul.mubr.bf16.gmra.mxu0 %v75
    %v1163 = vpop.f32.mrf.mxu0
    %v1164 = vadd.f32 %v1103, %v1163
    %v1165 = vpop.f32.mrf.mxu0
    %v1166 = vadd.f32 %v1105, %v1165
    %v1167 = vpop.f32.mrf.mxu0
    %v1168 = vadd.f32 %v1107, %v1167
    %v1169 = vpop.f32.mrf.mxu0
    %v1170 = vadd.f32 %v1109, %v1169
    %1171 = vmatprep.mubr.bf16.mxu0 %v82
    %1172 = vmatmul.mubr.bf16.gmra.mxu0 %v81
    %v1173 = vpop.f32.mrf.mxu0
    %v1174 = vadd.f32 %v1113, %v1173
    %v1175 = vpop.f32.mrf.mxu0
    %v1176 = vadd.f32 %v1115, %v1175
    %v1177 = vpop.f32.mrf.mxu0
    %v1178 = vadd.f32 %v1117, %v1177
    %v1179 = vpop.f32.mrf.mxu0
    %v1180 = vadd.f32 %v1119, %v1179
    %1181 = vmatprep.mubr.bf16.mxu0 %v88
    %1182 = vmatmul.mubr.bf16.gmra.mxu0 %v87
    %v1183 = vpop.f32.mrf.mxu0
    %v1184 = vadd.f32 %v1123, %v1183
    %v1185 = vpop.f32.mrf.mxu0
    %v1186 = vadd.f32 %v1125, %v1185
    %v1187 = vpop.f32.mrf.mxu0
    %v1188 = vpop.f32.mrf.mxu0
    %1189 = vdwg.mxu0
    %1190 = vmatprep.subr.bf16.mxu0 %v898
    %1191 = vmatpush1.bf16.msra.mxu0 %v897
    %1192 = vmatprep.subr.bf16.mxu0 %v895
    %1193 = vmatpush1.bf16.msra.mxu0 %v894
    %1194 = vmatprep.subr.bf16.mxu0 %v892
    %1195 = vmatpush1.bf16.msra.mxu0 %v891
    %1196 = vmatprep.subr.bf16.mxu0 %v889
    %1197 = vmatpush1.bf16.msra.mxu0 %v888
    %1198 = vmatprep.subr.bf16.mxu0 %v886
    %1199 = vmatpush1.bf16.msra.mxu0 %v885
    %1200 = vmatprep.subr.bf16.mxu0 %v883
    %1201 = vmatpush1.bf16.msra.mxu0 %v882
    %1202 = vmatprep.subr.bf16.mxu0 %v880
    %1203 = vmatpush1.bf16.msra.mxu0 %v879
    %1204 = vmatprep.subr.bf16.mxu0 %v877
    %1205 = vmatpush1.bf16.msra.mxu0 %v876
    %1206 = vmatprep.subr.bf16.mxu0 %v922
    %1207 = vmatpush2.bf16.msra.mxu0 %v921
    %1208 = vmatprep.subr.bf16.mxu0 %v919
    %1209 = vmatpush2.bf16.msra.mxu0 %v918
    %1210 = vmatprep.subr.bf16.mxu0 %v916
    %1211 = vmatpush2.bf16.msra.mxu0 %v915
    %1212 = vmatprep.subr.bf16.mxu0 %v913
    %1213 = vmatpush2.bf16.msra.mxu0 %v912
    %1214 = vmatprep.subr.bf16.mxu0 %v910
    %1215 = vmatpush2.bf16.msra.mxu0 %v909
    %1216 = vmatprep.subr.bf16.mxu0 %v907
    %1217 = vmatpush2.bf16.msra.mxu0 %v906
    %1218 = vmatprep.subr.bf16.mxu0 %v904
    %1219 = vmatpush2.bf16.msra.mxu0 %v903
    %1220 = vmatprep.subr.bf16.mxu0 %v901
    %1221 = vmatpush2.bf16.msra.mxu0 %v900
    %1222 = vmatprep.mubr.bf16.mxu0 %v78
    %1223 = vmatmul.mubr.bf16.gmra.mxu0 %v77
    %v1224 = vpop.f32.mrf.mxu0
    %v1225 = vadd.f32 %v1164, %v1224
    %v1226 = vpop.f32.mrf.mxu0
    %v1227 = vadd.f32 %v1166, %v1226
    %v1228 = vpop.f32.mrf.mxu0
    %v1229 = vadd.f32 %v1168, %v1228
    %v1230 = vpop.f32.mrf.mxu0
    %v1231 = vadd.f32 %v1170, %v1230
    %1232 = vmatprep.mubr.bf16.mxu0 %v84
    %1233 = vmatmul.mubr.bf16.gmra.mxu0 %v83
    %v1234 = vpop.f32.mrf.mxu0
    %v1235 = vadd.f32 %v1174, %v1234
    %v1236 = vpop.f32.mrf.mxu0
    %v1237 = vadd.f32 %v1176, %v1236
    %v1238 = vpop.f32.mrf.mxu0
    %v1239 = vadd.f32 %v1178, %v1238
    %v1240 = vpop.f32.mrf.mxu0
    %v1241 = vadd.f32 %v1180, %v1240
    %1242 = vmatprep.mubr.bf16.mxu0 %v90
    %1243 = vmatmul.mubr.bf16.gmra.mxu0 %v89
    %v1244 = vpop.f32.mrf.mxu0
    %v1245 = vadd.f32 %v1184, %v1244
    %v1246 = vpop.f32.mrf.mxu0
    %v1247 = vadd.f32 %v1186, %v1246
    %v1248 = vpop.f32.mrf.mxu0
    %v1249 = vpop.f32.mrf.mxu0
    %1250 = vdwg.mxu0
    %1251 = vmatprep.subr.bf16.mxu0 0
    %1252 = vmatpush1.bf16.msra.mxu0 %v803
    %1253 = vmatprep.subr.bf16.mxu0 0
    %1254 = vmatpush1.bf16.msra.mxu0 %v800
    %1255 = vmatprep.subr.bf16.mxu0 0
    %1256 = vmatpush1.bf16.msra.mxu0 %v797
    %1257 = vmatprep.subr.bf16.mxu0 0
    %1258 = vmatpush1.bf16.msra.mxu0 %v794
    %1259 = vmatprep.subr.bf16.mxu0 0
    %1260 = vmatpush1.bf16.msra.mxu0 %v791
    %1261 = vmatprep.subr.bf16.mxu0 0
    %1262 = vmatpush1.bf16.msra.mxu0 %v788
    %1263 = vmatprep.subr.bf16.mxu0 0
    %1264 = vmatpush1.bf16.msra.mxu0 %v785
    %1265 = vmatprep.subr.bf16.mxu0 0
    %1266 = vmatpush1.bf16.msra.mxu0 %v782
    %1267 = vmatprep.subr.bf16.mxu0 0
    %1268 = vmatpush2.bf16.msra.mxu0 %v827
    %1269 = vmatprep.subr.bf16.mxu0 0
    %1270 = vmatpush2.bf16.msra.mxu0 %v824
    %1271 = vmatprep.subr.bf16.mxu0 0
    %1272 = vmatpush2.bf16.msra.mxu0 %v821
    %1273 = vmatprep.subr.bf16.mxu0 0
    %1274 = vmatpush2.bf16.msra.mxu0 %v818
    %1275 = vmatprep.subr.bf16.mxu0 0
    %1276 = vmatpush2.bf16.msra.mxu0 %v815
    %1277 = vmatprep.subr.bf16.mxu0 0
    %1278 = vmatpush2.bf16.msra.mxu0 %v812
    %1279 = vmatprep.subr.bf16.mxu0 0
    %1280 = vmatpush2.bf16.msra.mxu0 %v809
    %1281 = vmatprep.subr.bf16.mxu0 0
    %1282 = vmatpush2.bf16.msra.mxu0 %v806
    %1283 = vmatprep.mubr.bf16.mxu0 %v74
    %1284 = vmatmul.mubr.bf16.gmra.mxu0 %v73
    %v1285 = vpop.f32.mrf.mxu0
    %v1286 = vadd.f32 %v296, %v1285
    %v1287 = vpop.f32.mrf.mxu0
    %v1288 = vpop.f32.mrf.mxu0
    %v1289 = vadd.f32 %v296, %v1288
    %v1290 = vpop.f32.mrf.mxu0
    %1291 = vmatprep.mubr.bf16.mxu0 %v80
    %1292 = vmatmul.mubr.bf16.gmra.mxu0 %v79
    %v1293 = vpop.f32.mrf.mxu0
    %v1294 = vadd.f32 %v296, %v1293
    %v1295 = vpop.f32.mrf.mxu0
    %v1296 = vpop.f32.mrf.mxu0
    %v1297 = vadd.f32 %v296, %v1296
    %v1298 = vpop.f32.mrf.mxu0
    %1299 = vmatprep.mubr.bf16.mxu0 %v86
    %1300 = vmatmul.mubr.bf16.gmra.mxu0 %v85
    %v1301 = vpop.f32.mrf.mxu0
    %v1302 = vadd.f32 %v296, %v1301
    %v1303 = vpop.f32.mrf.mxu0
    %v1304 = vpop.f32.mrf.mxu0
    %v1305 = vpop.f32.mrf.mxu0
    %1306 = vdwg.mxu0
    %1307 = vmatprep.subr.bf16.mxu0 0
    %1308 = vmatpush1.bf16.msra.mxu0 %v851
    %1309 = vmatprep.subr.bf16.mxu0 0
    %1310 = vmatpush1.bf16.msra.mxu0 %v848
    %1311 = vmatprep.subr.bf16.mxu0 0
    %1312 = vmatpush1.bf16.msra.mxu0 %v845
    %1313 = vmatprep.subr.bf16.mxu0 0
    %1314 = vmatpush1.bf16.msra.mxu0 %v842
    %1315 = vmatprep.subr.bf16.mxu0 0
    %1316 = vmatpush1.bf16.msra.mxu0 %v839
    %1317 = vmatprep.subr.bf16.mxu0 0
    %1318 = vmatpush1.bf16.msra.mxu0 %v836
    %1319 = vmatprep.subr.bf16.mxu0 0
    %1320 = vmatpush1.bf16.msra.mxu0 %v833
    %1321 = vmatprep.subr.bf16.mxu0 0
    %1322 = vmatpush1.bf16.msra.mxu0 %v830
    %1323 = vmatprep.subr.bf16.mxu0 0
    %1324 = vmatpush2.bf16.msra.mxu0 %v875
    %1325 = vmatprep.subr.bf16.mxu0 0
    %1326 = vmatpush2.bf16.msra.mxu0 %v872
    %1327 = vmatprep.subr.bf16.mxu0 0
    %1328 = vmatpush2.bf16.msra.mxu0 %v869
    %1329 = vmatprep.subr.bf16.mxu0 0
    %1330 = vmatpush2.bf16.msra.mxu0 %v866
    %1331 = vmatprep.subr.bf16.mxu0 0
    %1332 = vmatpush2.bf16.msra.mxu0 %v863
    %1333 = vmatprep.subr.bf16.mxu0 0
    %1334 = vmatpush2.bf16.msra.mxu0 %v860
    %1335 = vmatprep.subr.bf16.mxu0 0
    %1336 = vmatpush2.bf16.msra.mxu0 %v857
    %1337 = vmatprep.subr.bf16.mxu0 0
    %1338 = vmatpush2.bf16.msra.mxu0 %v854
    %1339 = vmatprep.mubr.bf16.mxu0 %v76
    %1340 = vmatmul.mubr.bf16.gmra.mxu0 %v75
    %v1341 = vpop.f32.mrf.mxu0
    %v1342 = vadd.f32 %v1286, %v1341
    %v1343 = vpop.f32.mrf.mxu0
    %v1344 = vpop.f32.mrf.mxu0
    %v1345 = vadd.f32 %v1289, %v1344
    %v1346 = vpop.f32.mrf.mxu0
    %1347 = vmatprep.mubr.bf16.mxu0 %v82
    %1348 = vmatmul.mubr.bf16.gmra.mxu0 %v81
    %v1349 = vpop.f32.mrf.mxu0
    %v1350 = vadd.f32 %v1294, %v1349
    %v1351 = vpop.f32.mrf.mxu0
    %v1352 = vpop.f32.mrf.mxu0
    %v1353 = vadd.f32 %v1297, %v1352
    %v1354 = vpop.f32.mrf.mxu0
    %1355 = vmatprep.mubr.bf16.mxu0 %v88
    %1356 = vmatmul.mubr.bf16.gmra.mxu0 %v87
    %v1357 = vpop.f32.mrf.mxu0
    %v1358 = vadd.f32 %v1302, %v1357
    %v1359 = vpop.f32.mrf.mxu0
    %v1360 = vpop.f32.mrf.mxu0
    %v1361 = vpop.f32.mrf.mxu0
    %1362 = vdwg.mxu0
    %1363 = vmatprep.subr.bf16.mxu0 0
    %1364 = vmatpush1.bf16.msra.mxu0 %v899
    %1365 = vmatprep.subr.bf16.mxu0 0
    %1366 = vmatpush1.bf16.msra.mxu0 %v896
    %1367 = vmatprep.subr.bf16.mxu0 0
    %1368 = vmatpush1.bf16.msra.mxu0 %v893
    %1369 = vmatprep.subr.bf16.mxu0 0
    %1370 = vmatpush1.bf16.msra.mxu0 %v890
    %1371 = vmatprep.subr.bf16.mxu0 0
    %1372 = vmatpush1.bf16.msra.mxu0 %v887
    %1373 = vmatprep.subr.bf16.mxu0 0
    %1374 = vmatpush1.bf16.msra.mxu0 %v884
    %1375 = vmatprep.subr.bf16.mxu0 0
    %1376 = vmatpush1.bf16.msra.mxu0 %v881
    %1377 = vmatprep.subr.bf16.mxu0 0
    %1378 = vmatpush1.bf16.msra.mxu0 %v878
    %1379 = vmatprep.subr.bf16.mxu0 0
    %1380 = vmatpush2.bf16.msra.mxu0 %v923
    %1381 = vmatprep.subr.bf16.mxu0 0
    %1382 = vmatpush2.bf16.msra.mxu0 %v920
    %1383 = vmatprep.subr.bf16.mxu0 0
    %1384 = vmatpush2.bf16.msra.mxu0 %v917
    %1385 = vmatprep.subr.bf16.mxu0 0
    %1386 = vmatpush2.bf16.msra.mxu0 %v914
    %1387 = vmatprep.subr.bf16.mxu0 0
    %1388 = vmatpush2.bf16.msra.mxu0 %v911
    %1389 = vmatprep.subr.bf16.mxu0 0
    %1390 = vmatpush2.bf16.msra.mxu0 %v908
    %1391 = vmatprep.subr.bf16.mxu0 0
    %1392 = vmatpush2.bf16.msra.mxu0 %v905
    %1393 = vmatprep.subr.bf16.mxu0 0
    %1394 = vmatpush2.bf16.msra.mxu0 %v902
    %1395 = vmatprep.mubr.bf16.mxu0 %v78
    %1396 = vmatmul.mubr.bf16.gmra.mxu0 %v77
    %v1397 = vpop.f32.mrf.mxu0
    %v1398 = vadd.f32 %v1342, %v1397
    %v1399 = vpop.f32.mrf.mxu0
    %v1400 = vpop.f32.mrf.mxu0
    %v1401 = vadd.f32 %v1345, %v1400
    %v1402 = vpop.f32.mrf.mxu0
    %1403 = vmatprep.mubr.bf16.mxu0 %v84
    %1404 = vmatmul.mubr.bf16.gmra.mxu0 %v83
    %v1405 = vpop.f32.mrf.mxu0
    %v1406 = vadd.f32 %v1350, %v1405
    %v1407 = vpop.f32.mrf.mxu0
    %v1408 = vpop.f32.mrf.mxu0
    %v1409 = vadd.f32 %v1353, %v1408
    %v1410 = vpop.f32.mrf.mxu0
    %1411 = vmatprep.mubr.bf16.mxu0 %v90
    %1412 = vmatmul.mubr.bf16.gmra.mxu0 %v89
    %v1413 = vpop.f32.mrf.mxu0
    %v1414 = vadd.f32 %v1358, %v1413
    %v1415 = vpop.f32.mrf.mxu0
    %v1416 = vpop.f32.mrf.mxu0
    %v1417 = vpop.f32.mrf.mxu0
    %1418 = vdwg.mxu0
    %v1419 = vmax.f32 %v1225, 0.0
    %v1420 = vmax.f32 %v1227, 0.0
    %v1421 = vmax.f32 %v1398, 0.0
    %v1422 = vmax.f32 %v1229, 0.0
    %v1423 = vmax.f32 %v1231, 0.0
    %v1424 = vmax.f32 %v1401, 0.0
    %v1425 = vmax.f32 %v1235, 0.0
    %v1426 = vmax.f32 %v1237, 0.0
    %v1427 = vmax.f32 %v1406, 0.0
    %v1428 = vmax.f32 %v1239, 0.0
    %v1429 = vmax.f32 %v1241, 0.0
    %v1430 = vmax.f32 %v1409, 0.0
    %v1431 = vmax.f32 %v1245, 0.0
    %v1432 = vmax.f32 %v1247, 0.0
    %v1433 = vmax.f32 %v1414, 0.0
    %v1434 = vpack.c.bf16 %v1422, %v1419
    %v1435 = vpack.c.bf16 %v1423, %v1420
    %v1436 = vpack.c.bf16 %v1424, %v1421
    %v1437 = vpack.c.bf16 %v1428, %v1425
    %v1438 = vpack.c.bf16 %v1429, %v1426
    %v1439 = vpack.c.bf16 %v1430, %v1427
    %v1440 = vpack.c.bf16 %v1431, %v1431
    %v1441 = vpack.c.bf16 %v1432, %v1432
    %v1442 = vpack.c.bf16 %v1433, %v1433
    %v1443 = vld [vmem:[%s3] sm:$0xff]
    %v1444 = vld [vmem:[%s3 + $0x8] sm:$0xff]
    %v1445 = vld [vmem:[%s3 + $0x10] sm:$0xff]
    %v1446 = vld [vmem:[%s3 + $0x18] sm:$0xff]
    %v1447 = vld [vmem:[%s3 + $0x20] sm:$0xff]
    %v1448 = vld [vmem:[%s3 + $0x28] sm:$0xff]
    %v1449 = vld [vmem:[%s3 + $0x30] sm:$0xff]
    %v1450 = vld [vmem:[%s3 + $0x38] sm:$0xff]
    %v1451 = vld [vmem:[%s3 + $0x40] sm:$0xff]
    %v1452 = vld [vmem:[%s3 + $0x48] sm:$0xff]
    %v1453 = vld [vmem:[%s3 + $0x50] sm:$0xff]
    %v1454 = vld [vmem:[%s3 + $0x58] sm:$0xff]
    %v1455 = vld [vmem:[%s3 + $0x60] sm:$0xff]
    %v1456 = vld [vmem:[%s3 + $0x68] sm:$0xff]
    %v1457 = vld [vmem:[%s3 + $0x70] sm:$0xff]
    %v1458 = vld [vmem:[%s3 + $0x78] sm:$0xff]
    %v1459 = vld [vmem:[%s3 + $0x80] sm:$0xff]
    %v1460 = vld [vmem:[%s3 + $0x88] sm:$0xff]
    %v1461 = vld [vmem:[%s3 + $0x90] sm:$0xff]
    %v1462 = vld [vmem:[%s3 + $0x98] sm:$0xff]
    %v1463 = vld [vmem:[%s3 + $0xa0] sm:$0xff]
    %v1464 = vld [vmem:[%s3 + $0xa8] sm:$0xff]
    %v1465 = vld [vmem:[%s3 + $0xb0] sm:$0xff]
    %v1466 = vld [vmem:[%s3 + $0xb8] sm:$0xff]
    %v1467 = vld [vmem:[%s3 + $0xc0] sm:$0xff]
    %v1468 = vld [vmem:[%s3 + $0xc8] sm:$0xff]
    %v1469 = vld [vmem:[%s3 + $0xd0] sm:$0xff]
    %v1470 = vld [vmem:[%s3 + $0xd8] sm:$0xff]
    %v1471 = vld [vmem:[%s3 + $0xe0] sm:$0xff]
    %v1472 = vld [vmem:[%s3 + $0xe8] sm:$0xff]
    %v1473 = vld [vmem:[%s3 + $0xf0] sm:$0xff]
    %v1474 = vld [vmem:[%s3 + $0xf8] sm:$0xff]
    %v1475 = vld [vmem:[%s3 + $0x100] sm:$0xff]
    %v1476 = vld [vmem:[%s3 + $0x108] sm:$0xff]
    %v1477 = vld [vmem:[%s3 + $0x110] sm:$0xff]
    %v1478 = vld [vmem:[%s3 + $0x118] sm:$0xff]
    %v1479 = vld [vmem:[%s3 + $0x120] sm:$0xff]
    %v1480 = vld [vmem:[%s3 + $0x128] sm:$0xff]
    %v1481 = vld [vmem:[%s3 + $0x130] sm:$0xff]
    %v1482 = vld [vmem:[%s3 + $0x138] sm:$0xff]
    %v1483 = vld [vmem:[%s3 + $0x140] sm:$0xff]
    %v1484 = vld [vmem:[%s3 + $0x148] sm:$0xff]
    %v1485 = vld [vmem:[%s3 + $0x150] sm:$0xff]
    %v1486 = vld [vmem:[%s3 + $0x158] sm:$0xff]
    %v1487 = vld [vmem:[%s3 + $0x160] sm:$0xff]
    %v1488 = vld [vmem:[%s3 + $0x168] sm:$0xff]
    %v1489 = vld [vmem:[%s3 + $0x170] sm:$0xff]
    %v1490 = vld [vmem:[%s3 + $0x178] sm:$0xff]
    %v1491 = vld [vmem:[%s4] sm:$0x3]
    %v1493 = vlaneseq
    %v1494 = vshrl.u32 %v1493, 7
    %v1495 = vsub.s32 0, %v1494
    %v1496 = vrot.slane %v1491, %v1495
    %v1497 = vlaneseq
    %v1498 = vshrl.u32 %v1497, 7
    %v1499 = vsub.s32 1, %v1498
    %v1500 = vrot.slane %v1491, %v1499
    %v1551 = vunpack.c.l.b16 %v1443
    %v1552 = vunpack.c.h.b16 %v1443
    %v1553 = vunpack.c.l.b16 %v1444
    %v1554 = vunpack.c.h.b16 %v1444
    %v1555 = vunpack.c.l.b16 %v1445
    %v1556 = vunpack.c.h.b16 %v1445
    %v1557 = vunpack.c.l.b16 %v1446
    %v1558 = vunpack.c.h.b16 %v1446
    %v1559 = vunpack.c.l.b16 %v1447
    %v1560 = vunpack.c.h.b16 %v1447
    %v1561 = vunpack.c.l.b16 %v1448
    %v1562 = vunpack.c.h.b16 %v1448
    %v1563 = vunpack.c.l.b16 %v1449
    %v1564 = vunpack.c.h.b16 %v1449
    %v1565 = vunpack.c.l.b16 %v1450
    %v1566 = vunpack.c.h.b16 %v1450
    %v1567 = vunpack.c.l.b16 %v1451
    %v1568 = vunpack.c.h.b16 %v1451
    %v1569 = vunpack.c.l.b16 %v1452
    %v1570 = vunpack.c.h.b16 %v1452
    %v1571 = vunpack.c.l.b16 %v1453
    %v1572 = vunpack.c.h.b16 %v1453
    %v1573 = vunpack.c.l.b16 %v1454
    %v1574 = vunpack.c.h.b16 %v1454
    %v1575 = vunpack.c.l.b16 %v1455
    %v1576 = vunpack.c.h.b16 %v1455
    %v1577 = vunpack.c.l.b16 %v1456
    %v1578 = vunpack.c.h.b16 %v1456
    %v1579 = vunpack.c.l.b16 %v1457
    %v1580 = vunpack.c.h.b16 %v1457
    %v1581 = vunpack.c.l.b16 %v1458
    %v1582 = vunpack.c.h.b16 %v1458
    %v1583 = vunpack.c.l.b16 %v1459
    %v1584 = vunpack.c.h.b16 %v1459
    %v1585 = vunpack.c.l.b16 %v1460
    %v1586 = vunpack.c.h.b16 %v1460
    %v1587 = vunpack.c.l.b16 %v1461
    %v1588 = vunpack.c.h.b16 %v1461
    %v1589 = vunpack.c.l.b16 %v1462
    %v1590 = vunpack.c.h.b16 %v1462
    %v1591 = vunpack.c.l.b16 %v1463
    %v1592 = vunpack.c.h.b16 %v1463
    %v1593 = vunpack.c.l.b16 %v1464
    %v1594 = vunpack.c.h.b16 %v1464
    %v1595 = vunpack.c.l.b16 %v1465
    %v1596 = vunpack.c.h.b16 %v1465
    %v1597 = vunpack.c.l.b16 %v1466
    %v1598 = vunpack.c.h.b16 %v1466
    %v1599 = vunpack.c.l.b16 %v1467
    %v1600 = vunpack.c.h.b16 %v1467
    %v1601 = vunpack.c.l.b16 %v1468
    %v1602 = vunpack.c.h.b16 %v1468
    %v1603 = vunpack.c.l.b16 %v1469
    %v1604 = vunpack.c.h.b16 %v1469
    %v1605 = vunpack.c.l.b16 %v1470
    %v1606 = vunpack.c.h.b16 %v1470
    %v1607 = vunpack.c.l.b16 %v1471
    %v1608 = vunpack.c.h.b16 %v1471
    %v1609 = vunpack.c.l.b16 %v1472
    %v1610 = vunpack.c.h.b16 %v1472
    %v1611 = vunpack.c.l.b16 %v1473
    %v1612 = vunpack.c.h.b16 %v1473
    %v1613 = vunpack.c.l.b16 %v1474
    %v1614 = vunpack.c.h.b16 %v1474
    %v1615 = vunpack.c.l.b16 %v1475
    %v1616 = vunpack.c.h.b16 %v1475
    %v1617 = vunpack.c.l.b16 %v1476
    %v1618 = vunpack.c.h.b16 %v1476
    %v1619 = vunpack.c.l.b16 %v1477
    %v1620 = vunpack.c.h.b16 %v1477
    %v1621 = vunpack.c.l.b16 %v1478
    %v1622 = vunpack.c.h.b16 %v1478
    %v1623 = vunpack.c.l.b16 %v1479
    %v1624 = vunpack.c.h.b16 %v1479
    %v1625 = vunpack.c.l.b16 %v1480
    %v1626 = vunpack.c.h.b16 %v1480
    %v1627 = vunpack.c.l.b16 %v1481
    %v1628 = vunpack.c.h.b16 %v1481
    %v1629 = vunpack.c.l.b16 %v1482
    %v1630 = vunpack.c.h.b16 %v1482
    %v1631 = vunpack.c.l.b16 %v1483
    %v1632 = vunpack.c.h.b16 %v1483
    %v1633 = vunpack.c.l.b16 %v1484
    %v1634 = vunpack.c.h.b16 %v1484
    %v1635 = vunpack.c.l.b16 %v1485
    %v1636 = vunpack.c.h.b16 %v1485
    %v1637 = vunpack.c.l.b16 %v1486
    %v1638 = vunpack.c.h.b16 %v1486
    %v1639 = vunpack.c.l.b16 %v1487
    %v1640 = vunpack.c.h.b16 %v1487
    %v1641 = vunpack.c.l.b16 %v1488
    %v1642 = vunpack.c.h.b16 %v1488
    %v1643 = vunpack.c.l.b16 %v1489
    %v1644 = vunpack.c.h.b16 %v1489
    %v1645 = vunpack.c.l.b16 %v1490
    %v1646 = vunpack.c.h.b16 %v1490
    %v1647 = vpack.c.b16 %v1553, %v1551
    %v1648 = vpack.c.b16 %v1554, %v1552
    %v1649 = vpack.c.b16 %v1557, %v1555
    %v1650 = vpack.c.b16 %v1558, %v1556
    %v1651 = vpack.c.b16 %v1561, %v1559
    %v1652 = vpack.c.b16 %v1562, %v1560
    %v1653 = vpack.c.b16 %v1565, %v1563
    %v1654 = vpack.c.b16 %v1566, %v1564
    %v1655 = vpack.c.b16 %v1569, %v1567
    %v1656 = vpack.c.b16 %v1570, %v1568
    %v1657 = vpack.c.b16 %v1573, %v1571
    %v1658 = vpack.c.b16 %v1574, %v1572
    %v1659 = vpack.c.b16 %v1577, %v1575
    %v1660 = vpack.c.b16 %v1578, %v1576
    %v1661 = vpack.c.b16 %v1581, %v1579
    %v1662 = vpack.c.b16 %v1582, %v1580
    %v1663 = vpack.c.b16 %v1585, %v1583
    %v1664 = vpack.c.b16 %v1586, %v1584
    %v1665 = vpack.c.b16 %v1589, %v1587
    %v1666 = vpack.c.b16 %v1590, %v1588
    %v1667 = vpack.c.b16 %v1593, %v1591
    %v1668 = vpack.c.b16 %v1594, %v1592
    %v1669 = vpack.c.b16 %v1597, %v1595
    %v1670 = vpack.c.b16 %v1598, %v1596
    %v1671 = vpack.c.b16 %v1601, %v1599
    %v1672 = vpack.c.b16 %v1602, %v1600
    %v1673 = vpack.c.b16 %v1605, %v1603
    %v1674 = vpack.c.b16 %v1606, %v1604
    %v1675 = vpack.c.b16 %v1609, %v1607
    %v1676 = vpack.c.b16 %v1610, %v1608
    %v1677 = vpack.c.b16 %v1613, %v1611
    %v1678 = vpack.c.b16 %v1614, %v1612
    %v1679 = vpack.c.b16 %v1617, %v1615
    %v1680 = vpack.c.b16 %v1618, %v1616
    %v1681 = vpack.c.b16 %v1621, %v1619
    %v1682 = vpack.c.b16 %v1622, %v1620
    %v1683 = vpack.c.b16 %v1625, %v1623
    %v1684 = vpack.c.b16 %v1626, %v1624
    %v1685 = vpack.c.b16 %v1629, %v1627
    %v1686 = vpack.c.b16 %v1630, %v1628
    %v1687 = vpack.c.b16 %v1633, %v1631
    %v1688 = vpack.c.b16 %v1634, %v1632
    %v1689 = vpack.c.b16 %v1637, %v1635
    %v1690 = vpack.c.b16 %v1638, %v1636
    %v1691 = vpack.c.b16 %v1641, %v1639
    %v1692 = vpack.c.b16 %v1642, %v1640
    %v1693 = vpack.c.b16 %v1645, %v1643
    %v1694 = vpack.c.b16 %v1646, %v1644
    %1743 = vmatprep.subr.bf16.mxu0 %v1662
    %1744 = vmatpush1.bf16.msra.mxu0 %v1661
    %1745 = vmatprep.subr.bf16.mxu0 %v1660
    %1746 = vmatpush1.bf16.msra.mxu0 %v1659
    %1747 = vmatprep.subr.bf16.mxu0 %v1658
    %1748 = vmatpush1.bf16.msra.mxu0 %v1657
    %1749 = vmatprep.subr.bf16.mxu0 %v1656
    %1750 = vmatpush1.bf16.msra.mxu0 %v1655
    %1751 = vmatprep.subr.bf16.mxu0 %v1654
    %1752 = vmatpush1.bf16.msra.mxu0 %v1653
    %1753 = vmatprep.subr.bf16.mxu0 %v1652
    %1754 = vmatpush1.bf16.msra.mxu0 %v1651
    %1755 = vmatprep.subr.bf16.mxu0 %v1650
    %1756 = vmatpush1.bf16.msra.mxu0 %v1649
    %1757 = vmatprep.subr.bf16.mxu0 %v1648
    %1758 = vmatpush1.bf16.msra.mxu0 %v1647
    %1759 = vmatprep.subr.bf16.mxu0 %v1678
    %1760 = vmatpush2.bf16.msra.mxu0 %v1677
    %1761 = vmatprep.subr.bf16.mxu0 %v1676
    %1762 = vmatpush2.bf16.msra.mxu0 %v1675
    %1763 = vmatprep.subr.bf16.mxu0 %v1674
    %1764 = vmatpush2.bf16.msra.mxu0 %v1673
    %1765 = vmatprep.subr.bf16.mxu0 %v1672
    %1766 = vmatpush2.bf16.msra.mxu0 %v1671
    %1767 = vmatprep.subr.bf16.mxu0 %v1670
    %1768 = vmatpush2.bf16.msra.mxu0 %v1669
    %1769 = vmatprep.subr.bf16.mxu0 %v1668
    %1770 = vmatpush2.bf16.msra.mxu0 %v1667
    %1771 = vmatprep.subr.bf16.mxu0 %v1666
    %1772 = vmatpush2.bf16.msra.mxu0 %v1665
    %1773 = vmatprep.subr.bf16.mxu0 %v1664
    %1774 = vmatpush2.bf16.msra.mxu0 %v1663
    %1775 = vmatprep.mubr.bf16.mxu0 %v1435
    %1776 = vmatmul.mubr.bf16.gmra.mxu0 %v1434
    %v1777 = vpop.f32.mrf.mxu0
    %v1778 = vadd.f32 %v1496, %v1777
    %v1779 = vpop.f32.mrf.mxu0
    %v1780 = vadd.f32 %v1500, %v1779
    %v1781 = vpop.f32.mrf.mxu0
    %v1782 = vadd.f32 %v1496, %v1781
    %v1783 = vpop.f32.mrf.mxu0
    %v1784 = vadd.f32 %v1500, %v1783
    %1785 = vmatprep.mubr.bf16.mxu0 %v1438
    %1786 = vmatmul.mubr.bf16.gmra.mxu0 %v1437
    %v1787 = vpop.f32.mrf.mxu0
    %v1788 = vadd.f32 %v1496, %v1787
    %v1789 = vpop.f32.mrf.mxu0
    %v1790 = vadd.f32 %v1500, %v1789
    %v1791 = vpop.f32.mrf.mxu0
    %v1792 = vadd.f32 %v1496, %v1791
    %v1793 = vpop.f32.mrf.mxu0
    %v1794 = vadd.f32 %v1500, %v1793
    %1795 = vmatprep.mubr.bf16.mxu0 %v1441
    %1796 = vmatmul.mubr.bf16.gmra.mxu0 %v1440
    %v1797 = vpop.f32.mrf.mxu0
    %v1798 = vadd.f32 %v1496, %v1797
    %v1799 = vpop.f32.mrf.mxu0
    %v1800 = vadd.f32 %v1500, %v1799
    %v1801 = vpop.f32.mrf.mxu0
    %v1802 = vpop.f32.mrf.mxu0
    %1803 = vdwg.mxu0
    %1804 = vmatprep.subr.bf16.mxu0 %v1694
    %1805 = vmatpush1.bf16.msra.mxu0 %v1693
    %1806 = vmatprep.subr.bf16.mxu0 %v1692
    %1807 = vmatpush1.bf16.msra.mxu0 %v1691
    %1808 = vmatprep.subr.bf16.mxu0 %v1690
    %1809 = vmatpush1.bf16.msra.mxu0 %v1689
    %1810 = vmatprep.subr.bf16.mxu0 %v1688
    %1811 = vmatpush1.bf16.msra.mxu0 %v1687
    %1812 = vmatprep.subr.bf16.mxu0 %v1686
    %1813 = vmatpush1.bf16.msra.mxu0 %v1685
    %1814 = vmatprep.subr.bf16.mxu0 %v1684
    %1815 = vmatpush1.bf16.msra.mxu0 %v1683
    %1816 = vmatprep.subr.bf16.mxu0 %v1682
    %1817 = vmatpush1.bf16.msra.mxu0 %v1681
    %1818 = vmatprep.subr.bf16.mxu0 %v1680
    %1819 = vmatpush1.bf16.msra.mxu0 %v1679
    %1820 = vmatprep.subr.bf16.mxu0 0
    %1821 = vmatpush2.bf16.msra.mxu0 0
    %1822 = vmatprep.subr.bf16.mxu0 0
    %1823 = vmatpush2.bf16.msra.mxu0 0
    %1824 = vmatprep.subr.bf16.mxu0 0
    %1825 = vmatpush2.bf16.msra.mxu0 0
    %1826 = vmatprep.subr.bf16.mxu0 0
    %1827 = vmatpush2.bf16.msra.mxu0 0
    %1828 = vmatprep.subr.bf16.mxu0 0
    %1829 = vmatpush2.bf16.msra.mxu0 0
    %1830 = vmatprep.subr.bf16.mxu0 0
    %1831 = vmatpush2.bf16.msra.mxu0 0
    %1832 = vmatprep.subr.bf16.mxu0 0
    %1833 = vmatpush2.bf16.msra.mxu0 0
    %1834 = vmatprep.subr.bf16.mxu0 0
    %1835 = vmatpush2.bf16.msra.mxu0 0
    %1836 = vmatprep.mubr.bf16.mxu0 0
    %1837 = vmatmul.mubr.bf16.gmra.mxu0 %v1436
    %v1838 = vpop.f32.mrf.mxu0
    %v1839 = vadd.f32 %v1778, %v1838
    %v1840 = vpop.f32.mrf.mxu0
    %v1841 = vadd.f32 %v1780, %v1840
    %v1842 = vpop.f32.mrf.mxu0
    %v1843 = vadd.f32 %v1782, %v1842
    %v1844 = vpop.f32.mrf.mxu0
    %v1845 = vadd.f32 %v1784, %v1844
    %1846 = vmatprep.mubr.bf16.mxu0 0
    %1847 = vmatmul.mubr.bf16.gmra.mxu0 %v1439
    %v1848 = vpop.f32.mrf.mxu0
    %v1849 = vadd.f32 %v1788, %v1848
    %v1850 = vpop.f32.mrf.mxu0
    %v1851 = vadd.f32 %v1790, %v1850
    %v1852 = vpop.f32.mrf.mxu0
    %v1853 = vadd.f32 %v1792, %v1852
    %v1854 = vpop.f32.mrf.mxu0
    %v1855 = vadd.f32 %v1794, %v1854
    %1856 = vmatprep.mubr.bf16.mxu0 0
    %1857 = vmatmul.mubr.bf16.gmra.mxu0 %v1442
    %v1858 = vpop.f32.mrf.mxu0
    %v1859 = vadd.f32 %v1798, %v1858
    %v1860 = vpop.f32.mrf.mxu0
    %v1861 = vadd.f32 %v1800, %v1860
    %v1862 = vpop.f32.mrf.mxu0
    %v1863 = vpop.f32.mrf.mxu0
    %1864 = vdwg.mxu0
    %v1865 = vmax.f32 %v1839, 0.0
    %v1866 = vmax.f32 %v1841, 0.0
    %v1867 = vmax.f32 %v1843, 0.0
    %v1868 = vmax.f32 %v1845, 0.0
    %v1869 = vmax.f32 %v1849, 0.0
    %v1870 = vmax.f32 %v1851, 0.0
    %v1871 = vmax.f32 %v1853, 0.0
    %v1872 = vmax.f32 %v1855, 0.0
    %v1873 = vmax.f32 %v1859, 0.0
    %v1874 = vmax.f32 %v1861, 0.0
    %v1875 = vld [vmem:[%s5] sm:$0x3]
    %v1877 = vlaneseq
    %v1878 = vshrl.u32 %v1877, 7
    %v1879 = vsub.s32 0, %v1878
    %v1880 = vrot.slane %v1875, %v1879
    %v1881 = vlaneseq
    %v1882 = vshrl.u32 %v1881, 7
    %v1883 = vsub.s32 1, %v1882
    %v1884 = vrot.slane %v1875, %v1883
    %v1887 = vmul.f32 %v1865, %v1880
    %v1888 = vmul.f32 %v1866, %v1884
    %v1889 = vmul.f32 %v1867, %v1880
    %v1890 = vmul.f32 %v1868, %v1884
    %v1891 = vmul.f32 %v1869, %v1880
    %v1892 = vmul.f32 %v1870, %v1884
    %v1893 = vmul.f32 %v1871, %v1880
    %v1894 = vmul.f32 %v1872, %v1884
    %v1895 = vmul.f32 %v1873, %v1880
    %v1896 = vmul.f32 %v1874, %v1884
    %vm1897 = vcmask 523264
    %v1898 = vsel %vm1897, %v1888, 0.0
    %v1899 = vadd.f32 %v1887, %v1898
    %1900 = vadd.xlane.f32.xlu0 %v1899
    %v1901 = vpop.xlane.xlu0 %1900
    %v1902 = vsel %vm1897, %v1890, 0.0
    %v1903 = vadd.f32 %v1889, %v1902
    %1904 = vadd.xlane.f32.xlu0 %v1903
    %v1905 = vpop.xlane.xlu0 %1904
    %v1906 = vsel %vm1897, %v1892, 0.0
    %v1907 = vadd.f32 %v1891, %v1906
    %1908 = vadd.xlane.f32.xlu0 %v1907
    %v1909 = vpop.xlane.xlu0 %1908
    %v1910 = vsel %vm1897, %v1894, 0.0
    %v1911 = vadd.f32 %v1893, %v1910
    %1912 = vadd.xlane.f32.xlu0 %v1911
    %v1913 = vpop.xlane.xlu0 %1912
    %v1914 = vsel %vm1897, %v1896, 0.0
    %v1915 = vadd.f32 %v1895, %v1914
    %1916 = vadd.xlane.f32.xlu0 %v1915
    %v1917 = vpop.xlane.xlu0 %1916
    %v1918 = vld [vmem:[#allocation2] sm:$0x1]
    %v1920 = vlaneseq
    %v1921 = vshrl.u32 %v1920, 7
    %v1922 = vsub.s32 0, %v1921
    %v1923 = vrot.slane %v1918, %v1922
    %v1925 = vadd.f32 %v1901, %v1923
    %v1926 = vadd.f32 %v1905, %v1923
    %v1927 = vadd.f32 %v1909, %v1923
    %v1928 = vadd.f32 %v1913, %v1923
    %v1929 = vadd.f32 %v1917, %v1923
    %vm1930 = vcmask 7168
    %1931 = vst.msk [vmem:[%s7] sm:$0xff] %vm1930, %v1925
    %1932 = vst.msk [vmem:[%s7 + $0x8] sm:$0xff] %vm1930, %v1926
    %1933 = vst.msk [vmem:[%s7 + $0x10] sm:$0xff] %vm1930, %v1927
    %1934 = vst.msk [vmem:[%s7 + $0x18] sm:$0xff] %vm1930, %v1928
    %1935 = vst.msk [vmem:[%s7 + $0x20] sm:$0xff] %vm1930, %v1929
    // Predicated region
    $region34: #{tpu_custom_call.1} parent=1 // pred_check
      _
    $region35: #{tpu_custom_call.1} parent=1 // pred_check_branch
      %1937 = sbr.rel (0) target = $region37
    $region36: #{tpu_custom_call.1} parent=1 // pred_region
      _
    $region37: #{tpu_custom_call.1} parent=1 // pred_fallthru
      _
    // Predicated region
    $region38: #{tpu_custom_call.1} parent=1 // pred_check
      _
    $region39: #{tpu_custom_call.1} parent=1 // pred_check_branch
      %1939 = sbr.rel (0) target = $region41
    $region40: #{tpu_custom_call.1} parent=1 // pred_region
      _
    $region41: #{tpu_custom_call.1} parent=1 // pred_fallthru
      _
    %1940 = vsyncpa [#allocation4], 1

</llo_original>
